<compile_context>
chip_gen: v7x
topology: tpu7x:2x2x1
jax: 0.10.0
libtpu: 0.0.40
codegen_flags: <defaults>
</compile_context>

<pallas_src>
import math
import functools

import jax
import jax.numpy as jnp
from jax.experimental import pallas as pl
from jax.experimental.pallas import tpu as pltpu


# ----------------------------- in-kernel helpers -----------------------------

def _layer_norm(x, alpha, bias, eps=1e-6):
    # torch.std default is unbiased (divide by N-1); divide via EUP reciprocal.
    mean = jnp.mean(x, axis=-1, keepdims=True)
    d = x - mean
    var = jnp.sum(d * d, axis=-1, keepdims=True) * (1.0 / (x.shape[-1] - 1))
    inv = pl.reciprocal(jnp.sqrt(var) + eps, approx=True)
    return (d * inv) * alpha + bias


# ------------------------------- fused kernel --------------------------------

def _encoder_layer_kernel(num_heads, batch, seq,
                          x_ref, bias_ref,
                          wqkv_ref, bqkv_ref, wo_ref, bo_ref,
                          ln1a_ref, ln1b_ref, ln2a_ref, ln2b_ref,
                          w1_ref, b1_ref, w2_ref, b2_ref,
                          lnfa_ref, lnfb_ref, wout_ref, bout_ref,
                          o_ref, x_scr):
    """One encoder layer per grid step; activation persists in VMEM scratch.

    Per-layer weight blocks (leading dim 1, indexed by the layer grid axis):
      wqkv : (1, D, 3D) bf16  (scale folded into the Q columns)
      bqkv : (1, 1, 3D) f32
      wo   : (1, D, D)  bf16      bo : (1, 1, D) f32
      w1/b1/w2/b2, ln1a/ln1b/ln2a/ln2b similarly stacked per layer.
    """
    l = pl.program_id(0)
    D = x_ref.shape[-1]
    dk = D // num_heads
    bf16 = jnp.bfloat16

    @pl.when(l == 0)
    def _():
        x_scr[...] = x_ref[...]

    x = x_scr[...]                         # (N, D) f32, N = B*S
    att_bias = bias_ref[...]               # (B, 1, S) f32 additive key-padding bias

    # ----- pre-norm multi-head self-attention (fused QKV, per-batch attention) -----
    x2 = _layer_norm(x, ln1a_ref[0], ln1b_ref[0])
    qkv = jnp.dot(x2.astype(bf16), wqkv_ref[0],
                  preferred_element_type=jnp.float32) + bqkv_ref[0]      # (N, 3D)
    qkv3 = qkv.reshape(batch, seq, 3 * D)                                # (B, S, 3D)

    ctxs = []
    for h in range(num_heads):             # static unroll over heads
        qh = qkv3[:, :, h * dk:(h + 1) * dk].astype(bf16)                # (B, S, dk)
        kh = qkv3[:, :, D + h * dk:D + (h + 1) * dk].astype(bf16)
        vh = qkv3[:, :, 2 * D + h * dk:2 * D + (h + 1) * dk].astype(bf16)
        # scores: 'bqd,bkd->bqk'  (scale already folded into Wq/bq)
        sc = jax.lax.dot_general(qh, kh, (((2,), (2,)), ((0,), (0,))),
                                 preferred_element_type=jnp.float32)     # (B, S, S)
        sc = sc + att_bias
        m = jnp.max(sc, axis=-1, keepdims=True)
        e = jnp.exp(sc - m)
        p = e * pl.reciprocal(jnp.sum(e, axis=-1, keepdims=True), approx=True)
        # context: 'bqk,bkd->bqd'
        ctx = jax.lax.dot_general(p.astype(bf16), vh, (((2,), (1,)), ((0,), (0,))),
                                  preferred_element_type=jnp.float32)    # (B, S, dk)
        ctxs.append(ctx)
    # concat heads (head-major lanes) -> single (N,D)@(D,D) output projection
    ctx_all = jnp.concatenate(ctxs, axis=-1).reshape(batch * seq, D)
    attn = jnp.dot(ctx_all.astype(bf16), wo_ref[0],
                   preferred_element_type=jnp.float32) + bo_ref[0]
    x = x + attn

    # ----- pre-norm feed-forward -----
    x2 = _layer_norm(x, ln2a_ref[0], ln2b_ref[0])
    h1 = jnp.dot(x2.astype(bf16), w1_ref[0],
                 preferred_element_type=jnp.float32) + b1_ref[0]
    h1 = jnp.maximum(h1, 0.0)
    ff = jnp.dot(h1.astype(bf16), w2_ref[0],
                 preferred_element_type=jnp.float32) + b2_ref[0]
    x = x + ff
    x_scr[...] = x

    # ----- last layer: final LayerNorm + output Linear (lane-padded vocab) -----
    @pl.when(l == pl.num_programs(0) - 1)
    def _():
        xf = _layer_norm(x, lnfa_ref[...], lnfb_ref[...])
        # TODO(synk): for realistic vocab sizes on v7x, tile the vocab dim on a
        # second grid axis / stream w_out instead of keeping it fully resident.
        o_ref[...] = jnp.dot(xf.astype(bf16), wout_ref[...],
                             preferred_element_type=jnp.float32) + bout_ref[...]


# ------------------------------ Pallas wrapper --------------------------------

def _resident(shape):
    """Full-array block whose index is constant across the layer grid axis
    (loaded once, stays VMEM-resident)."""
    n = len(shape)
    return pl.BlockSpec(shape, lambda l, _n=n: (0,) * _n)


def _per_layer(tail_shape):
    """(1, *tail) block indexed by the layer id -> streamed/prefetched per layer."""
    n = len(tail_shape)
    return pl.BlockSpec((1,) + tuple(tail_shape),
                        lambda l, _n=n: (l,) + (0,) * _n)


def fused_encoder(x2d, att_bias, packed, num_layers, num_heads, batch, seq):
    N, D = x2d.shape
    v_pad = packed["w_out"].shape[-1]

    per_layer_names = ["wqkv", "bqkv", "wo", "bo",
                       "ln1a", "ln1b", "ln2a", "ln2b",
                       "w1", "b1", "w2", "b2"]
    final_names = ["lna", "lnb", "w_out", "b_out"]

    inputs = [x2d, att_bias]
    inputs += [packed[n] for n in per_layer_names]
    inputs += [packed[n] for n in final_names]

    in_specs = [_resident(x2d.shape), _resident(att_bias.shape)]
    in_specs += [_per_layer(packed[n].shape[1:]) for n in per_layer_names]
    in_specs += [_resident(packed[n].shape) for n in final_names]

    kernel = functools.partial(_encoder_layer_kernel, num_heads, batch, seq)
    return pl.pallas_call(
        kernel,
        out_shape=jax.ShapeDtypeStruct((N, v_pad), jnp.float32),
        grid=(num_layers,),
        in_specs=in_specs,
        out_specs=pl.BlockSpec((N, v_pad), lambda l: (0, 0)),
        scratch_shapes=[pltpu.VMEM((N, D), jnp.float32)],   # activation slab, persists
        compiler_params=pltpu.CompilerParams(
            dimension_semantics=("arbitrary",),
            vmem_limit_bytes=48 * 1024 * 1024),
    )(*inputs)


# ----------------------------- glue / parameters ------------------------------

def positional_encoding(seq_len, d_model):
    pos = jnp.arange(seq_len, dtype=jnp.float32)[:, None]
    dims = jnp.arange(d_model, dtype=jnp.float32)[None, :]
    rates = 1.0 / jnp.power(10000.0, (2.0 * jnp.floor(dims / 2.0)) / d_model)
    ang = pos * rates
    return jnp.where(dims % 2 == 0, jnp.sin(ang), jnp.cos(ang)).astype(jnp.float32)


def init_params(key, src_vocab, trg_vocab, d_model, d_ff, num_layers):
    def linear(k, fan_in, fan_out):
        lim = 1.0 / math.sqrt(fan_in)
        kw, kb = jax.random.split(k)
        w = jax.random.uniform(kw, (fan_in, fan_out), jnp.float32, -lim, lim)
        b = jax.random.uniform(kb, (1, fan_out), jnp.float32, -lim, lim)
        return w, b

    keys = jax.random.split(key, num_layers + 2)
    params = {"embed": 0.02 * jax.random.normal(keys[0], (src_vocab, d_model),
                                                jnp.float32)}
    layers = []
    for i in range(num_layers):
        lk = jax.random.split(keys[1 + i], 6)
        wq, bq = linear(lk[0], d_model, d_model)
        wk, bk = linear(lk[1], d_model, d_model)
        wv, bv = linear(lk[2], d_model, d_model)
        wo, bo = linear(lk[3], d_model, d_model)
        w1, b1 = linear(lk[4], d_model, d_ff)
        w2, b2 = linear(lk[5], d_ff, d_model)
        layers.append(dict(
            wq=wq, bq=bq, wk=wk, bk=bk, wv=wv, bv=bv, wo=wo, bo=bo,
            ln1a=jnp.ones((1, d_model), jnp.float32),
            ln1b=jnp.zeros((1, d_model), jnp.float32),
            ln2a=jnp.ones((1, d_model), jnp.float32),
            ln2b=jnp.zeros((1, d_model), jnp.float32),
            w1=w1, b1=b1, w2=w2, b2=b2))
    params["layers"] = layers
    w_out, b_out = linear(keys[-1], d_model, trg_vocab)
    params["lna"] = jnp.ones((1, d_model), jnp.float32)
    params["lnb"] = jnp.zeros((1, d_model), jnp.float32)
    params["w_out"] = w_out
    params["b_out"] = b_out
    return params


def pack_params(params, num_heads):
    """One-time layout prep: stack layers with a leading L dim, fuse Wq|Wk|Wv into
    one (D,3D) bf16 weight (1/sqrt(dk) folded into Wq/bq), bf16 matmul weights,
    zero-pad the vocab dim of the output projection to a lane multiple."""
    layers = params["layers"]
    D = params["embed"].shape[-1]
    dk = D // num_heads
    scale = 1.0 / math.sqrt(dk)
    bf16 = jnp.bfloat16

    packed = {
        "wqkv": jnp.stack([jnp.concatenate([l["wq"] * scale, l["wk"], l["wv"]],
                                           axis=1) for l in layers]).astype(bf16),
        "bqkv": jnp.stack([jnp.concatenate([l["bq"] * scale, l["bk"], l["bv"]],
                                           axis=1) for l in layers]),
        "wo": jnp.stack([l["wo"] for l in layers]).astype(bf16),
        "bo": jnp.stack([l["bo"] for l in layers]),
        "ln1a": jnp.stack([l["ln1a"] for l in layers]),
        "ln1b": jnp.stack([l["ln1b"] for l in layers]),
        "ln2a": jnp.stack([l["ln2a"] for l in layers]),
        "ln2b": jnp.stack([l["ln2b"] for l in layers]),
        "w1": jnp.stack([l["w1"] for l in layers]).astype(bf16),
        "b1": jnp.stack([l["b1"] for l in layers]),
        "w2": jnp.stack([l["w2"] for l in layers]).astype(bf16),
        "b2": jnp.stack([l["b2"] for l in layers]),
        "lna": params["lna"],
        "lnb": params["lnb"],
    }
    V = params["w_out"].shape[-1]
    v_pad = ((V + 127) // 128) * 128
    packed["w_out"] = jnp.pad(params["w_out"], ((0, 0), (0, v_pad - V))).astype(bf16)
    packed["b_out"] = jnp.pad(params["b_out"], ((0, 0), (0, v_pad - V)))
    return packed


def transformer_encoder_forward(src, src_mask, params, packed, num_heads):
    B, S = src.shape
    d_model = params["embed"].shape[-1]
    num_layers = len(params["layers"])
    V = params["w_out"].shape[-1]

    # TODO(synk): token-id embedding gather + sinusoidal PE stay in plain JAX
    # (tiny gather; no clean small-shape Pallas equivalent).
    x = jnp.take(params["embed"], src, axis=0) * math.sqrt(d_model)
    x = x + positional_encoding(S, d_model)[None]
    # TODO(synk): dropout is a no-op here (dropout=0.0 / eval mode).

    x2d = x.reshape(B * S, d_model).astype(jnp.float32)
    # key-padding mask -> additive (B,1,S) bias, computed once outside the kernel
    att_bias = jnp.where(src_mask.reshape(B, 1, S) != 0, 0.0, -1e9).astype(jnp.float32)

    out = fused_encoder(x2d, att_bias, packed, num_layers, num_heads, B, S)
    return out.reshape(B, S, -1)[:, :, :V]


# ----------------------------------- main -------------------------------------

if __name__ == "__main__":
    SRC_VOCAB, TRG_VOCAB = 50, 40
    D_MODEL, D_FF = 32, 64
    NUM_LAYERS, NUM_HEADS = 2, 4
    B, S = 2, 8

    key = jax.random.PRNGKey(0)
    k_param, k_src = jax.random.split(key)

    params = init_params(k_param, SRC_VOCAB, TRG_VOCAB, D_MODEL, D_FF, NUM_LAYERS)
    packed = pack_params(params, NUM_HEADS)

    src = jax.random.randint(k_src, (B, S), 0, SRC_VOCAB, dtype=jnp.int32)
    lengths = jnp.array([S, 5], dtype=jnp.int32)
    src_mask = (jnp.arange(S)[None, :] < lengths[:, None]).astype(jnp.int32)[:, None, :]

    out = transformer_encoder_forward(src, src_mask, params, packed, NUM_HEADS)
    out = jax.block_until_ready(out)
    assert out.shape == (B, S, TRG_VOCAB) and out.dtype == jnp.float32
    print("KERNEL_OK")
</pallas_src>

<mosaic_0001>
module attributes {stable_mosaic.version = 11 : i64} {
  func.func @_encoder_layer_kernel(%arg0: i32, %arg1: memref<16x32xf32, #tpu.memory_space<vmem>>, %arg2: memref<2x1x8xf32, #tpu.memory_space<vmem>>, %arg3: memref<1x32x96xbf16, #tpu.memory_space<vmem>>, %arg4: memref<1x1x96xf32, #tpu.memory_space<vmem>>, %arg5: memref<1x32x32xbf16, #tpu.memory_space<vmem>>, %arg6: memref<1x1x32xf32, #tpu.memory_space<vmem>>, %arg7: memref<1x1x32xf32, #tpu.memory_space<vmem>>, %arg8: memref<1x1x32xf32, #tpu.memory_space<vmem>>, %arg9: memref<1x1x32xf32, #tpu.memory_space<vmem>>, %arg10: memref<1x1x32xf32, #tpu.memory_space<vmem>>, %arg11: memref<1x32x64xbf16, #tpu.memory_space<vmem>>, %arg12: memref<1x1x64xf32, #tpu.memory_space<vmem>>, %arg13: memref<1x64x32xbf16, #tpu.memory_space<vmem>>, %arg14: memref<1x1x32xf32, #tpu.memory_space<vmem>>, %arg15: memref<1x32xf32, #tpu.memory_space<vmem>>, %arg16: memref<1x32xf32, #tpu.memory_space<vmem>>, %arg17: memref<32x128xbf16, #tpu.memory_space<vmem>>, %arg18: memref<1x128xf32, #tpu.memory_space<vmem>>, %arg19: memref<16x128xf32, #tpu.memory_space<vmem>>, %arg20: memref<16x32xf32, #tpu.memory_space<vmem>>) attributes {dimension_semantics = [#tpu.dimension_semantics<arbitrary>], iteration_bounds = array<i64: 2>, scalar_prefetch = 0 : i64, scratch_operands = 1 : i64, tpu.core_type = #tpu.core_type<tc>, window_params = [{pipeline_mode = #tpu.pipeline_mode<synchronous>, transform_indices = @transform_0, window_bounds = array<i64: 16, 32>}, {pipeline_mode = #tpu.pipeline_mode<synchronous>, transform_indices = @transform_1, window_bounds = array<i64: 2, 1, 8>}, {transform_indices = @transform_2, window_bounds = array<i64: 1, 32, 96>}, {transform_indices = @transform_3, window_bounds = array<i64: 1, 1, 96>}, {transform_indices = @transform_4, window_bounds = array<i64: 1, 32, 32>}, {transform_indices = @transform_5, window_bounds = array<i64: 1, 1, 32>}, {transform_indices = @transform_6, window_bounds = array<i64: 1, 1, 32>}, {transform_indices = @transform_7, window_bounds = array<i64: 1, 1, 32>}, {transform_indices = @transform_8, window_bounds = array<i64: 1, 1, 32>}, {transform_indices = @transform_9, window_bounds = array<i64: 1, 1, 32>}, {transform_indices = @transform_10, window_bounds = array<i64: 1, 32, 64>}, {transform_indices = @transform_11, window_bounds = array<i64: 1, 1, 64>}, {transform_indices = @transform_12, window_bounds = array<i64: 1, 64, 32>}, {transform_indices = @transform_13, window_bounds = array<i64: 1, 1, 32>}, {pipeline_mode = #tpu.pipeline_mode<synchronous>, transform_indices = @transform_14, window_bounds = array<i64: 1, 32>}, {pipeline_mode = #tpu.pipeline_mode<synchronous>, transform_indices = @transform_15, window_bounds = array<i64: 1, 32>}, {pipeline_mode = #tpu.pipeline_mode<synchronous>, transform_indices = @transform_16, window_bounds = array<i64: 32, 128>}, {pipeline_mode = #tpu.pipeline_mode<synchronous>, transform_indices = @transform_17, window_bounds = array<i64: 1, 128>}, {pipeline_mode = #tpu.pipeline_mode<synchronous>, transform_indices = @transform_18, window_bounds = array<i64: 16, 128>}]} {
    %c0_i32 = arith.constant 0 : i32
    %0 = arith.cmpi eq, %arg0, %c0_i32 : i32
    %1 = arith.extui %0 : i1 to i32
    %c0_i32_0 = arith.constant 0 : i32
    %2 = arith.cmpi ne, %1, %c0_i32_0 : i32
    scf.if %2 {
      %c0_74 = arith.constant 0 : index
      %c0_75 = arith.constant 0 : index
      %182 = vector.load %arg1[%c0_74, %c0_75] : memref<16x32xf32, #tpu.memory_space<vmem>>, vector<16x32xf32>
      %c0_76 = arith.constant 0 : index
      %c0_77 = arith.constant 0 : index
      %183 = vector.load %arg20[%c0_76, %c0_77] : memref<16x32xf32, #tpu.memory_space<vmem>>, vector<16x32xf32>
      tpu.vector_store %arg20[%c0_76, %c0_77], %182 {strides = array<i32>} : memref<16x32xf32, #tpu.memory_space<vmem>>, vector<16x32xf32>,
    } else {
    }
    %c0 = arith.constant 0 : index
    %c0_1 = arith.constant 0 : index
    %3 = vector.load %arg20[%c0, %c0_1] : memref<16x32xf32, #tpu.memory_space<vmem>>, vector<16x32xf32>
    %c0_2 = arith.constant 0 : index
    %c0_3 = arith.constant 0 : index
    %c0_4 = arith.constant 0 : index
    %4 = vector.load %arg2[%c0_2, %c0_3, %c0_4] : memref<2x1x8xf32, #tpu.memory_space<vmem>>, vector<2x1x8xf32>
    %c0_5 = arith.constant 0 : index
    %c0_6 = arith.constant 0 : index
    %c0_7 = arith.constant 0 : index
    %5 = vector.load %arg7[%c0_5, %c0_6, %c0_7] : memref<1x1x32xf32, #tpu.memory_space<vmem>>, vector<1x1x32xf32>
    %6 = vector.shape_cast %5 : vector<1x1x32xf32> to vector<1x32xf32>
    %c0_8 = arith.constant 0 : index
    %c0_9 = arith.constant 0 : index
    %c0_10 = arith.constant 0 : index
    %7 = vector.load %arg8[%c0_8, %c0_9, %c0_10] : memref<1x1x32xf32, #tpu.memory_space<vmem>>, vector<1x1x32xf32>
    %8 = vector.shape_cast %7 : vector<1x1x32xf32> to vector<1x32xf32>
    %cst = arith.constant dense<0.000000e+00> : vector<16xf32>
    %9 = vector.multi_reduction <add>, %3, %cst [1] : vector<16x32xf32> to vector<16xf32>
    %10 = vector.shape_cast %9 : vector<16xf32> to vector<16x1xf32>
    %cst_11 = arith.constant 3.200000e+01 : f32
    %11 = vector.broadcast %cst_11 : f32 to vector<16x1xf32>
    %12 = arith.divf %10, %11 : vector<16x1xf32>
    %13 = vector.broadcast %12 : vector<16x1xf32> to vector<16x32xf32>
    %14 = arith.subf %3, %13 : vector<16x32xf32>
    %15 = arith.mulf %14, %14 : vector<16x32xf32>
    %cst_12 = arith.constant dense<0.000000e+00> : vector<16xf32>
    %16 = vector.multi_reduction <add>, %15, %cst_12 [1] : vector<16x32xf32> to vector<16xf32>
    %17 = vector.shape_cast %16 : vector<16xf32> to vector<16x1xf32>
    %cst_13 = arith.constant 0.0322580636 : f32
    %18 = vector.broadcast %cst_13 : f32 to vector<16x1xf32>
    %19 = arith.mulf %17, %18 : vector<16x1xf32>
    %20 = math.sqrt %19 : vector<16x1xf32>
    %cst_14 = arith.constant 9.99999997E-7 : f32
    %21 = vector.broadcast %cst_14 : f32 to vector<16x1xf32>
    %22 = arith.addf %20, %21 : vector<16x1xf32>
    %23 = tpu.reciprocal %22 {approx = true} : vector<16x1xf32> -> vector<16x1xf32>
    %24 = vector.broadcast %23 : vector<16x1xf32> to vector<16x32xf32>
    %25 = arith.mulf %14, %24 : vector<16x32xf32>
    %26 = vector.broadcast %6 : vector<1x32xf32> to vector<16x32xf32>
    %27 = arith.mulf %25, %26 : vector<16x32xf32>
    %28 = vector.broadcast %8 : vector<1x32xf32> to vector<16x32xf32>
    %29 = arith.addf %27, %28 : vector<16x32xf32>
    %30 = arith.truncf %29 : vector<16x32xf32> to vector<16x32xbf16>
    %c0_15 = arith.constant 0 : index
    %c0_16 = arith.constant 0 : index
    %c0_17 = arith.constant 0 : index
    %31 = vector.load %arg3[%c0_15, %c0_16, %c0_17] : memref<1x32x96xbf16, #tpu.memory_space<vmem>>, vector<1x32x96xbf16>
    %32 = vector.shape_cast %31 : vector<1x32x96xbf16> to vector<32x96xbf16>
    %cst_18 = arith.constant dense<0.000000e+00> : vector<16x96xf32>
    %33 = tpu.matmul %30, %32, %cst_18 {dimension_numbers = #tpu.dot_dimension_numbers<[1], [0], [0], [1], [0, 0, 1, 1], [], []>} : vector<16x32xbf16>, vector<32x96xbf16>, vector<16x96xf32> -> vector<16x96xf32>
    %c0_19 = arith.constant 0 : index
    %c0_20 = arith.constant 0 : index
    %c0_21 = arith.constant 0 : index
    %34 = vector.load %arg4[%c0_19, %c0_20, %c0_21] : memref<1x1x96xf32, #tpu.memory_space<vmem>>, vector<1x1x96xf32>
    %35 = vector.shape_cast %34 : vector<1x1x96xf32> to vector<1x96xf32>
    %36 = vector.broadcast %35 : vector<1x96xf32> to vector<16x96xf32>
    %37 = arith.addf %33, %36 : vector<16x96xf32>
    %38 = vector.shape_cast %37 : vector<16x96xf32> to vector<2x8x96xf32>
    %39 = vector.extract_strided_slice %38 {offsets = [0, 0, 0], sizes = [2, 8, 8], strides = [1, 1, 1]} : vector<2x8x96xf32> to vector<2x8x8xf32>
    %40 = arith.truncf %39 : vector<2x8x8xf32> to vector<2x8x8xbf16>
    %41 = vector.extract_strided_slice %38 {offsets = [0, 0, 32], sizes = [2, 8, 8], strides = [1, 1, 1]} : vector<2x8x96xf32> to vector<2x8x8xf32>
    %42 = arith.truncf %41 : vector<2x8x8xf32> to vector<2x8x8xbf16>
    %43 = vector.extract_strided_slice %38 {offsets = [0, 0, 64], sizes = [2, 8, 8], strides = [1, 1, 1]} : vector<2x8x96xf32> to vector<2x8x8xf32>
    %44 = arith.truncf %43 : vector<2x8x8xf32> to vector<2x8x8xbf16>
    %cst_22 = arith.constant dense<0.000000e+00> : vector<2x8x8xf32>
    %45 = tpu.matmul %40, %42, %cst_22 {dimension_numbers = #tpu.dot_dimension_numbers<[2], [2], [1], [1], [0, 0, 0, 1, 1, 1], [0], [0]>} : vector<2x8x8xbf16>, vector<2x8x8xbf16>, vector<2x8x8xf32> -> vector<2x8x8xf32>
    %46 = vector.broadcast %4 : vector<2x1x8xf32> to vector<2x8x8xf32>
    %47 = arith.addf %45, %46 : vector<2x8x8xf32>
    %cst_23 = arith.constant dense<0xFF800000> : vector<2x8xf32>
    %48 = vector.multi_reduction <maximumf>, %47, %cst_23 [2] : vector<2x8x8xf32> to vector<2x8xf32>
    %49 = vector.shape_cast %48 : vector<2x8xf32> to vector<2x8x1xf32>
    %50 = vector.broadcast %49 : vector<2x8x1xf32> to vector<2x8x8xf32>
    %51 = arith.subf %47, %50 : vector<2x8x8xf32>
    %52 = math.exp %51 : vector<2x8x8xf32>
    %cst_24 = arith.constant dense<0.000000e+00> : vector<2x8xf32>
    %53 = vector.multi_reduction <add>, %52, %cst_24 [2] : vector<2x8x8xf32> to vector<2x8xf32>
    %54 = vector.shape_cast %53 : vector<2x8xf32> to vector<2x8x1xf32>
    %55 = tpu.reciprocal %54 {approx = true} : vector<2x8x1xf32> -> vector<2x8x1xf32>
    %56 = vector.broadcast %55 : vector<2x8x1xf32> to vector<2x8x8xf32>
    %57 = arith.mulf %52, %56 : vector<2x8x8xf32>
    %58 = arith.truncf %57 : vector<2x8x8xf32> to vector<2x8x8xbf16>
    %cst_25 = arith.constant dense<0.000000e+00> : vector<2x8x8xf32>
    %59 = tpu.matmul %58, %44, %cst_25 {dimension_numbers = #tpu.dot_dimension_numbers<[2], [1], [1], [2], [0, 0, 0, 1, 1, 2], [0], [0]>} : vector<2x8x8xbf16>, vector<2x8x8xbf16>, vector<2x8x8xf32> -> vector<2x8x8xf32>
    %60 = vector.extract_strided_slice %38 {offsets = [0, 0, 8], sizes = [2, 8, 8], strides = [1, 1, 1]} : vector<2x8x96xf32> to vector<2x8x8xf32>
    %61 = arith.truncf %60 : vector<2x8x8xf32> to vector<2x8x8xbf16>
    %62 = vector.extract_strided_slice %38 {offsets = [0, 0, 40], sizes = [2, 8, 8], strides = [1, 1, 1]} : vector<2x8x96xf32> to vector<2x8x8xf32>
    %63 = arith.truncf %62 : vector<2x8x8xf32> to vector<2x8x8xbf16>
    %64 = vector.extract_strided_slice %38 {offsets = [0, 0, 72], sizes = [2, 8, 8], strides = [1, 1, 1]} : vector<2x8x96xf32> to vector<2x8x8xf32>
    %65 = arith.truncf %64 : vector<2x8x8xf32> to vector<2x8x8xbf16>
    %cst_26 = arith.constant dense<0.000000e+00> : vector<2x8x8xf32>
    %66 = tpu.matmul %61, %63, %cst_26 {dimension_numbers = #tpu.dot_dimension_numbers<[2], [2], [1], [1], [0, 0, 0, 1, 1, 1], [0], [0]>} : vector<2x8x8xbf16>, vector<2x8x8xbf16>, vector<2x8x8xf32> -> vector<2x8x8xf32>
    %67 = vector.broadcast %4 : vector<2x1x8xf32> to vector<2x8x8xf32>
    %68 = arith.addf %66, %67 : vector<2x8x8xf32>
    %cst_27 = arith.constant dense<0xFF800000> : vector<2x8xf32>
    %69 = vector.multi_reduction <maximumf>, %68, %cst_27 [2] : vector<2x8x8xf32> to vector<2x8xf32>
    %70 = vector.shape_cast %69 : vector<2x8xf32> to vector<2x8x1xf32>
    %71 = vector.broadcast %70 : vector<2x8x1xf32> to vector<2x8x8xf32>
    %72 = arith.subf %68, %71 : vector<2x8x8xf32>
    %73 = math.exp %72 : vector<2x8x8xf32>
    %cst_28 = arith.constant dense<0.000000e+00> : vector<2x8xf32>
    %74 = vector.multi_reduction <add>, %73, %cst_28 [2] : vector<2x8x8xf32> to vector<2x8xf32>
    %75 = vector.shape_cast %74 : vector<2x8xf32> to vector<2x8x1xf32>
    %76 = tpu.reciprocal %75 {approx = true} : vector<2x8x1xf32> -> vector<2x8x1xf32>
    %77 = vector.broadcast %76 : vector<2x8x1xf32> to vector<2x8x8xf32>
    %78 = arith.mulf %73, %77 : vector<2x8x8xf32>
    %79 = arith.truncf %78 : vector<2x8x8xf32> to vector<2x8x8xbf16>
    %cst_29 = arith.constant dense<0.000000e+00> : vector<2x8x8xf32>
    %80 = tpu.matmul %79, %65, %cst_29 {dimension_numbers = #tpu.dot_dimension_numbers<[2], [1], [1], [2], [0, 0, 0, 1, 1, 2], [0], [0]>} : vector<2x8x8xbf16>, vector<2x8x8xbf16>, vector<2x8x8xf32> -> vector<2x8x8xf32>
    %81 = vector.extract_strided_slice %38 {offsets = [0, 0, 16], sizes = [2, 8, 8], strides = [1, 1, 1]} : vector<2x8x96xf32> to vector<2x8x8xf32>
    %82 = arith.truncf %81 : vector<2x8x8xf32> to vector<2x8x8xbf16>
    %83 = vector.extract_strided_slice %38 {offsets = [0, 0, 48], sizes = [2, 8, 8], strides = [1, 1, 1]} : vector<2x8x96xf32> to vector<2x8x8xf32>
    %84 = arith.truncf %83 : vector<2x8x8xf32> to vector<2x8x8xbf16>
    %85 = vector.extract_strided_slice %38 {offsets = [0, 0, 80], sizes = [2, 8, 8], strides = [1, 1, 1]} : vector<2x8x96xf32> to vector<2x8x8xf32>
    %86 = arith.truncf %85 : vector<2x8x8xf32> to vector<2x8x8xbf16>
    %cst_30 = arith.constant dense<0.000000e+00> : vector<2x8x8xf32>
    %87 = tpu.matmul %82, %84, %cst_30 {dimension_numbers = #tpu.dot_dimension_numbers<[2], [2], [1], [1], [0, 0, 0, 1, 1, 1], [0], [0]>} : vector<2x8x8xbf16>, vector<2x8x8xbf16>, vector<2x8x8xf32> -> vector<2x8x8xf32>
    %88 = vector.broadcast %4 : vector<2x1x8xf32> to vector<2x8x8xf32>
    %89 = arith.addf %87, %88 : vector<2x8x8xf32>
    %cst_31 = arith.constant dense<0xFF800000> : vector<2x8xf32>
    %90 = vector.multi_reduction <maximumf>, %89, %cst_31 [2] : vector<2x8x8xf32> to vector<2x8xf32>
    %91 = vector.shape_cast %90 : vector<2x8xf32> to vector<2x8x1xf32>
    %92 = vector.broadcast %91 : vector<2x8x1xf32> to vector<2x8x8xf32>
    %93 = arith.subf %89, %92 : vector<2x8x8xf32>
    %94 = math.exp %93 : vector<2x8x8xf32>
    %cst_32 = arith.constant dense<0.000000e+00> : vector<2x8xf32>
    %95 = vector.multi_reduction <add>, %94, %cst_32 [2] : vector<2x8x8xf32> to vector<2x8xf32>
    %96 = vector.shape_cast %95 : vector<2x8xf32> to vector<2x8x1xf32>
    %97 = tpu.reciprocal %96 {approx = true} : vector<2x8x1xf32> -> vector<2x8x1xf32>
    %98 = vector.broadcast %97 : vector<2x8x1xf32> to vector<2x8x8xf32>
    %99 = arith.mulf %94, %98 : vector<2x8x8xf32>
    %100 = arith.truncf %99 : vector<2x8x8xf32> to vector<2x8x8xbf16>
    %cst_33 = arith.constant dense<0.000000e+00> : vector<2x8x8xf32>
    %101 = tpu.matmul %100, %86, %cst_33 {dimension_numbers = #tpu.dot_dimension_numbers<[2], [1], [1], [2], [0, 0, 0, 1, 1, 2], [0], [0]>} : vector<2x8x8xbf16>, vector<2x8x8xbf16>, vector<2x8x8xf32> -> vector<2x8x8xf32>
    %102 = vector.extract_strided_slice %38 {offsets = [0, 0, 24], sizes = [2, 8, 8], strides = [1, 1, 1]} : vector<2x8x96xf32> to vector<2x8x8xf32>
    %103 = arith.truncf %102 : vector<2x8x8xf32> to vector<2x8x8xbf16>
    %104 = vector.extract_strided_slice %38 {offsets = [0, 0, 56], sizes = [2, 8, 8], strides = [1, 1, 1]} : vector<2x8x96xf32> to vector<2x8x8xf32>
    %105 = arith.truncf %104 : vector<2x8x8xf32> to vector<2x8x8xbf16>
    %106 = vector.extract_strided_slice %38 {offsets = [0, 0, 88], sizes = [2, 8, 8], strides = [1, 1, 1]} : vector<2x8x96xf32> to vector<2x8x8xf32>
    %107 = arith.truncf %106 : vector<2x8x8xf32> to vector<2x8x8xbf16>
    %cst_34 = arith.constant dense<0.000000e+00> : vector<2x8x8xf32>
    %108 = tpu.matmul %103, %105, %cst_34 {dimension_numbers = #tpu.dot_dimension_numbers<[2], [2], [1], [1], [0, 0, 0, 1, 1, 1], [0], [0]>} : vector<2x8x8xbf16>, vector<2x8x8xbf16>, vector<2x8x8xf32> -> vector<2x8x8xf32>
    %109 = vector.broadcast %4 : vector<2x1x8xf32> to vector<2x8x8xf32>
    %110 = arith.addf %108, %109 : vector<2x8x8xf32>
    %cst_35 = arith.constant dense<0xFF800000> : vector<2x8xf32>
    %111 = vector.multi_reduction <maximumf>, %110, %cst_35 [2] : vector<2x8x8xf32> to vector<2x8xf32>
    %112 = vector.shape_cast %111 : vector<2x8xf32> to vector<2x8x1xf32>
    %113 = vector.broadcast %112 : vector<2x8x1xf32> to vector<2x8x8xf32>
    %114 = arith.subf %110, %113 : vector<2x8x8xf32>
    %115 = math.exp %114 : vector<2x8x8xf32>
    %cst_36 = arith.constant dense<0.000000e+00> : vector<2x8xf32>
    %116 = vector.multi_reduction <add>, %115, %cst_36 [2] : vector<2x8x8xf32> to vector<2x8xf32>
    %117 = vector.shape_cast %116 : vector<2x8xf32> to vector<2x8x1xf32>
    %118 = tpu.reciprocal %117 {approx = true} : vector<2x8x1xf32> -> vector<2x8x1xf32>
    %119 = vector.broadcast %118 : vector<2x8x1xf32> to vector<2x8x8xf32>
    %120 = arith.mulf %115, %119 : vector<2x8x8xf32>
    %121 = arith.truncf %120 : vector<2x8x8xf32> to vector<2x8x8xbf16>
    %cst_37 = arith.constant dense<0.000000e+00> : vector<2x8x8xf32>
    %122 = tpu.matmul %121, %107, %cst_37 {dimension_numbers = #tpu.dot_dimension_numbers<[2], [1], [1], [2], [0, 0, 0, 1, 1, 2], [0], [0]>} : vector<2x8x8xbf16>, vector<2x8x8xbf16>, vector<2x8x8xf32> -> vector<2x8x8xf32>
    %123 = tpu.concatenate %59, %80, %101, %122 in 2 : vector<2x8x8xf32>, vector<2x8x8xf32>, vector<2x8x8xf32>, vector<2x8x8xf32> -> vector<2x8x32xf32>
    %124 = vector.shape_cast %123 : vector<2x8x32xf32> to vector<16x32xf32>
    %125 = arith.truncf %124 : vector<16x32xf32> to vector<16x32xbf16>
    %c0_38 = arith.constant 0 : index
    %c0_39 = arith.constant 0 : index
    %c0_40 = arith.constant 0 : index
    %126 = vector.load %arg5[%c0_38, %c0_39, %c0_40] : memref<1x32x32xbf16, #tpu.memory_space<vmem>>, vector<1x32x32xbf16>
    %127 = vector.shape_cast %126 : vector<1x32x32xbf16> to vector<32x32xbf16>
    %cst_41 = arith.constant dense<0.000000e+00> : vector<16x32xf32>
    %128 = tpu.matmul %125, %127, %cst_41 {dimension_numbers = #tpu.dot_dimension_numbers<[1], [0], [0], [1], [0, 0, 1, 1], [], []>} : vector<16x32xbf16>, vector<32x32xbf16>, vector<16x32xf32> -> vector<16x32xf32>
    %c0_42 = arith.constant 0 : index
    %c0_43 = arith.constant 0 : index
    %c0_44 = arith.constant 0 : index
    %129 = vector.load %arg6[%c0_42, %c0_43, %c0_44] : memref<1x1x32xf32, #tpu.memory_space<vmem>>, vector<1x1x32xf32>
    %130 = vector.shape_cast %129 : vector<1x1x32xf32> to vector<1x32xf32>
    %131 = vector.broadcast %130 : vector<1x32xf32> to vector<16x32xf32>
    %132 = arith.addf %128, %131 : vector<16x32xf32>
    %133 = arith.addf %3, %132 : vector<16x32xf32>
    %c0_45 = arith.constant 0 : index
    %c0_46 = arith.constant 0 : index
    %c0_47 = arith.constant 0 : index
    %134 = vector.load %arg9[%c0_45, %c0_46, %c0_47] : memref<1x1x32xf32, #tpu.memory_space<vmem>>, vector<1x1x32xf32>
    %135 = vector.shape_cast %134 : vector<1x1x32xf32> to vector<1x32xf32>
    %c0_48 = arith.constant 0 : index
    %c0_49 = arith.constant 0 : index
    %c0_50 = arith.constant 0 : index
    %136 = vector.load %arg10[%c0_48, %c0_49, %c0_50] : memref<1x1x32xf32, #tpu.memory_space<vmem>>, vector<1x1x32xf32>
    %137 = vector.shape_cast %136 : vector<1x1x32xf32> to vector<1x32xf32>
    %cst_51 = arith.constant dense<0.000000e+00> : vector<16xf32>
    %138 = vector.multi_reduction <add>, %133, %cst_51 [1] : vector<16x32xf32> to vector<16xf32>
    %139 = vector.shape_cast %138 : vector<16xf32> to vector<16x1xf32>
    %cst_52 = arith.constant 3.200000e+01 : f32
    %140 = vector.broadcast %cst_52 : f32 to vector<16x1xf32>
    %141 = arith.divf %139, %140 : vector<16x1xf32>
    %142 = vector.broadcast %141 : vector<16x1xf32> to vector<16x32xf32>
    %143 = arith.subf %133, %142 : vector<16x32xf32>
    %144 = arith.mulf %143, %143 : vector<16x32xf32>
    %cst_53 = arith.constant dense<0.000000e+00> : vector<16xf32>
    %145 = vector.multi_reduction <add>, %144, %cst_53 [1] : vector<16x32xf32> to vector<16xf32>
    %146 = vector.shape_cast %145 : vector<16xf32> to vector<16x1xf32>
    %cst_54 = arith.constant 0.0322580636 : f32
    %147 = vector.broadcast %cst_54 : f32 to vector<16x1xf32>
    %148 = arith.mulf %146, %147 : vector<16x1xf32>
    %149 = math.sqrt %148 : vector<16x1xf32>
    %cst_55 = arith.constant 9.99999997E-7 : f32
    %150 = vector.broadcast %cst_55 : f32 to vector<16x1xf32>
    %151 = arith.addf %149, %150 : vector<16x1xf32>
    %152 = tpu.reciprocal %151 {approx = true} : vector<16x1xf32> -> vector<16x1xf32>
    %153 = vector.broadcast %152 : vector<16x1xf32> to vector<16x32xf32>
    %154 = arith.mulf %143, %153 : vector<16x32xf32>
    %155 = vector.broadcast %135 : vector<1x32xf32> to vector<16x32xf32>
    %156 = arith.mulf %154, %155 : vector<16x32xf32>
    %157 = vector.broadcast %137 : vector<1x32xf32> to vector<16x32xf32>
    %158 = arith.addf %156, %157 : vector<16x32xf32>
    %159 = arith.truncf %158 : vector<16x32xf32> to vector<16x32xbf16>
    %c0_56 = arith.constant 0 : index
    %c0_57 = arith.constant 0 : index
    %c0_58 = arith.constant 0 : index
    %160 = vector.load %arg11[%c0_56, %c0_57, %c0_58] : memref<1x32x64xbf16, #tpu.memory_space<vmem>>, vector<1x32x64xbf16>
    %161 = vector.shape_cast %160 : vector<1x32x64xbf16> to vector<32x64xbf16>
    %cst_59 = arith.constant dense<0.000000e+00> : vector<16x64xf32>
    %162 = tpu.matmul %159, %161, %cst_59 {dimension_numbers = #tpu.dot_dimension_numbers<[1], [0], [0], [1], [0, 0, 1, 1], [], []>} : vector<16x32xbf16>, vector<32x64xbf16>, vector<16x64xf32> -> vector<16x64xf32>
    %c0_60 = arith.constant 0 : index
    %c0_61 = arith.constant 0 : index
    %c0_62 = arith.constant 0 : index
    %163 = vector.load %arg12[%c0_60, %c0_61, %c0_62] : memref<1x1x64xf32, #tpu.memory_space<vmem>>, vector<1x1x64xf32>
    %164 = vector.shape_cast %163 : vector<1x1x64xf32> to vector<1x64xf32>
    %165 = vector.broadcast %164 : vector<1x64xf32> to vector<16x64xf32>
    %166 = arith.addf %162, %165 : vector<16x64xf32>
    %cst_63 = arith.constant 0.000000e+00 : f32
    %167 = vector.broadcast %cst_63 : f32 to vector<16x64xf32>
    %168 = arith.maximumf %166, %167 : vector<16x64xf32>
    %169 = arith.truncf %168 : vector<16x64xf32> to vector<16x64xbf16>
    %c0_64 = arith.constant 0 : index
    %c0_65 = arith.constant 0 : index
    %c0_66 = arith.constant 0 : index
    %170 = vector.load %arg13[%c0_64, %c0_65, %c0_66] : memref<1x64x32xbf16, #tpu.memory_space<vmem>>, vector<1x64x32xbf16>
    %171 = vector.shape_cast %170 : vector<1x64x32xbf16> to vector<64x32xbf16>
    %cst_67 = arith.constant dense<0.000000e+00> : vector<16x32xf32>
    %172 = tpu.matmul %169, %171, %cst_67 {dimension_numbers = #tpu.dot_dimension_numbers<[1], [0], [0], [1], [0, 0, 1, 1], [], []>} : vector<16x64xbf16>, vector<64x32xbf16>, vector<16x32xf32> -> vector<16x32xf32>
    %c0_68 = arith.constant 0 : index
    %c0_69 = arith.constant 0 : index
    %c0_70 = arith.constant 0 : index
    %173 = vector.load %arg14[%c0_68, %c0_69, %c0_70] : memref<1x1x32xf32, #tpu.memory_space<vmem>>, vector<1x1x32xf32>
    %174 = vector.shape_cast %173 : vector<1x1x32xf32> to vector<1x32xf32>
    %175 = vector.broadcast %174 : vector<1x32xf32> to vector<16x32xf32>
    %176 = arith.addf %172, %175 : vector<16x32xf32>
    %177 = arith.addf %133, %176 : vector<16x32xf32>
    %c0_71 = arith.constant 0 : index
    %c0_72 = arith.constant 0 : index
    %178 = vector.load %arg20[%c0_71, %c0_72] : memref<16x32xf32, #tpu.memory_space<vmem>>, vector<16x32xf32>
    tpu.vector_store %arg20[%c0_71, %c0_72], %177 {strides = array<i32>} : memref<16x32xf32, #tpu.memory_space<vmem>>, vector<16x32xf32>,
    %c1_i32 = arith.constant 1 : i32
    %179 = arith.cmpi eq, %arg0, %c1_i32 : i32
    %180 = arith.extui %179 : i1 to i32
    %c0_i32_73 = arith.constant 0 : i32
    %181 = arith.cmpi ne, %180, %c0_i32_73 : i32
    scf.if %181 {
      %c0_74 = arith.constant 0 : index
      %c0_75 = arith.constant 0 : index
      %182 = vector.load %arg15[%c0_74, %c0_75] : memref<1x32xf32, #tpu.memory_space<vmem>>, vector<1x32xf32>
      %c0_76 = arith.constant 0 : index
      %c0_77 = arith.constant 0 : index
      %183 = vector.load %arg16[%c0_76, %c0_77] : memref<1x32xf32, #tpu.memory_space<vmem>>, vector<1x32xf32>
      %cst_78 = arith.constant dense<0.000000e+00> : vector<16xf32>
      %184 = vector.multi_reduction <add>, %177, %cst_78 [1] : vector<16x32xf32> to vector<16xf32>
      %185 = vector.shape_cast %184 : vector<16xf32> to vector<16x1xf32>
      %cst_79 = arith.constant 3.200000e+01 : f32
      %186 = vector.broadcast %cst_79 : f32 to vector<16x1xf32>
      %187 = arith.divf %185, %186 : vector<16x1xf32>
      %188 = vector.broadcast %187 : vector<16x1xf32> to vector<16x32xf32>
      %189 = arith.subf %177, %188 : vector<16x32xf32>
      %190 = arith.mulf %189, %189 : vector<16x32xf32>
      %cst_80 = arith.constant dense<0.000000e+00> : vector<16xf32>
      %191 = vector.multi_reduction <add>, %190, %cst_80 [1] : vector<16x32xf32> to vector<16xf32>
      %192 = vector.shape_cast %191 : vector<16xf32> to vector<16x1xf32>
      %cst_81 = arith.constant 0.0322580636 : f32
      %193 = vector.broadcast %cst_81 : f32 to vector<16x1xf32>
      %194 = arith.mulf %192, %193 : vector<16x1xf32>
      %195 = math.sqrt %194 : vector<16x1xf32>
      %cst_82 = arith.constant 9.99999997E-7 : f32
      %196 = vector.broadcast %cst_82 : f32 to vector<16x1xf32>
      %197 = arith.addf %195, %196 : vector<16x1xf32>
      %198 = tpu.reciprocal %197 {approx = true} : vector<16x1xf32> -> vector<16x1xf32>
      %199 = vector.broadcast %198 : vector<16x1xf32> to vector<16x32xf32>
      %200 = arith.mulf %189, %199 : vector<16x32xf32>
      %201 = vector.broadcast %182 : vector<1x32xf32> to vector<16x32xf32>
      %202 = arith.mulf %200, %201 : vector<16x32xf32>
      %203 = vector.broadcast %183 : vector<1x32xf32> to vector<16x32xf32>
      %204 = arith.addf %202, %203 : vector<16x32xf32>
      %205 = arith.truncf %204 : vector<16x32xf32> to vector<16x32xbf16>
      %c0_83 = arith.constant 0 : index
      %c0_84 = arith.constant 0 : index
      %206 = vector.load %arg17[%c0_83, %c0_84] : memref<32x128xbf16, #tpu.memory_space<vmem>>, vector<32x128xbf16>
      %cst_85 = arith.constant dense<0.000000e+00> : vector<16x128xf32>
      %207 = tpu.matmul %205, %206, %cst_85 {dimension_numbers = #tpu.dot_dimension_numbers<[1], [0], [0], [1], [0, 0, 1, 1], [], []>} : vector<16x32xbf16>, vector<32x128xbf16>, vector<16x128xf32> -> vector<16x128xf32>
      %c0_86 = arith.constant 0 : index
      %c0_87 = arith.constant 0 : index
      %208 = vector.load %arg18[%c0_86, %c0_87] : memref<1x128xf32, #tpu.memory_space<vmem>>, vector<1x128xf32>
      %209 = vector.broadcast %208 : vector<1x128xf32> to vector<16x128xf32>
      %210 = arith.addf %207, %209 : vector<16x128xf32>
      %c0_88 = arith.constant 0 : index
      %c0_89 = arith.constant 0 : index
      %211 = vector.load %arg19[%c0_88, %c0_89] : memref<16x128xf32, #tpu.memory_space<vmem>>, vector<16x128xf32>
      tpu.vector_store %arg19[%c0_88, %c0_89], %210 {strides = array<i32>} : memref<16x128xf32, #tpu.memory_space<vmem>>, vector<16x128xf32>,
    } else {
    }
    return
  }
  func.func @transform_0(%arg0: i32) -> (i32, i32) {
    %c0_i32 = arith.constant 0 : i32
    %c0_i32_0 = arith.constant 0 : i32
    %c0_i32_1 = arith.constant 0 : i32
    return %c0_i32, %c0_i32_0 : i32, i32
  }
  func.func @transform_1(%arg0: i32) -> (i32, i32, i32) {
    %c0_i32 = arith.constant 0 : i32
    %c0_i32_0 = arith.constant 0 : i32
    %c0_i32_1 = arith.constant 0 : i32
    %c0_i32_2 = arith.constant 0 : i32
    return %c0_i32, %c0_i32_0, %c0_i32_1 : i32, i32, i32
  }
  func.func @transform_2(%arg0: i32) -> (i32, i32, i32) {
    %c0_i32 = arith.constant 0 : i32
    %c0_i32_0 = arith.constant 0 : i32
    %c0_i32_1 = arith.constant 0 : i32
    return %arg0, %c0_i32, %c0_i32_0 : i32, i32, i32
  }
  func.func @transform_3(%arg0: i32) -> (i32, i32, i32) {
    %c0_i32 = arith.constant 0 : i32
    %c0_i32_0 = arith.constant 0 : i32
    %c0_i32_1 = arith.constant 0 : i32
    return %arg0, %c0_i32, %c0_i32_0 : i32, i32, i32
  }
  func.func @transform_4(%arg0: i32) -> (i32, i32, i32) {
    %c0_i32 = arith.constant 0 : i32
    %c0_i32_0 = arith.constant 0 : i32
    %c0_i32_1 = arith.constant 0 : i32
    return %arg0, %c0_i32, %c0_i32_0 : i32, i32, i32
  }
  func.func @transform_5(%arg0: i32) -> (i32, i32, i32) {
    %c0_i32 = arith.constant 0 : i32
    %c0_i32_0 = arith.constant 0 : i32
    %c0_i32_1 = arith.constant 0 : i32
    return %arg0, %c0_i32, %c0_i32_0 : i32, i32, i32
  }
  func.func @transform_6(%arg0: i32) -> (i32, i32, i32) {
    %c0_i32 = arith.constant 0 : i32
    %c0_i32_0 = arith.constant 0 : i32
    %c0_i32_1 = arith.constant 0 : i32
    return %arg0, %c0_i32, %c0_i32_0 : i32, i32, i32
  }
  func.func @transform_7(%arg0: i32) -> (i32, i32, i32) {
    %c0_i32 = arith.constant 0 : i32
    %c0_i32_0 = arith.constant 0 : i32
    %c0_i32_1 = arith.constant 0 : i32
    return %arg0, %c0_i32, %c0_i32_0 : i32, i32, i32
  }
  func.func @transform_8(%arg0: i32) -> (i32, i32, i32) {
    %c0_i32 = arith.constant 0 : i32
    %c0_i32_0 = arith.constant 0 : i32
    %c0_i32_1 = arith.constant 0 : i32
    return %arg0, %c0_i32, %c0_i32_0 : i32, i32, i32
  }
  func.func @transform_9(%arg0: i32) -> (i32, i32, i32) {
    %c0_i32 = arith.constant 0 : i32
    %c0_i32_0 = arith.constant 0 : i32
    %c0_i32_1 = arith.constant 0 : i32
    return %arg0, %c0_i32, %c0_i32_0 : i32, i32, i32
  }
  func.func @transform_10(%arg0: i32) -> (i32, i32, i32) {
    %c0_i32 = arith.constant 0 : i32
    %c0_i32_0 = arith.constant 0 : i32
    %c0_i32_1 = arith.constant 0 : i32
    return %arg0, %c0_i32, %c0_i32_0 : i32, i32, i32
  }
  func.func @transform_11(%arg0: i32) -> (i32, i32, i32) {
    %c0_i32 = arith.constant 0 : i32
    %c0_i32_0 = arith.constant 0 : i32
    %c0_i32_1 = arith.constant 0 : i32
    return %arg0, %c0_i32, %c0_i32_0 : i32, i32, i32
  }
  func.func @transform_12(%arg0: i32) -> (i32, i32, i32) {
    %c0_i32 = arith.constant 0 : i32
    %c0_i32_0 = arith.constant 0 : i32
    %c0_i32_1 = arith.constant 0 : i32
    return %arg0, %c0_i32, %c0_i32_0 : i32, i32, i32
  }
  func.func @transform_13(%arg0: i32) -> (i32, i32, i32) {
    %c0_i32 = arith.constant 0 : i32
    %c0_i32_0 = arith.constant 0 : i32
    %c0_i32_1 = arith.constant 0 : i32
    return %arg0, %c0_i32, %c0_i32_0 : i32, i32, i32
  }
  func.func @transform_14(%arg0: i32) -> (i32, i32) {
    %c0_i32 = arith.constant 0 : i32
    %c0_i32_0 = arith.constant 0 : i32
    %c0_i32_1 = arith.constant 0 : i32
    return %c0_i32, %c0_i32_0 : i32, i32
  }
  func.func @transform_15(%arg0: i32) -> (i32, i32) {
    %c0_i32 = arith.constant 0 : i32
    %c0_i32_0 = arith.constant 0 : i32
    %c0_i32_1 = arith.constant 0 : i32
    return %c0_i32, %c0_i32_0 : i32, i32
  }
  func.func @transform_16(%arg0: i32) -> (i32, i32) {
    %c0_i32 = arith.constant 0 : i32
    %c0_i32_0 = arith.constant 0 : i32
    %c0_i32_1 = arith.constant 0 : i32
    return %c0_i32, %c0_i32_0 : i32, i32
  }
  func.func @transform_17(%arg0: i32) -> (i32, i32) {
    %c0_i32 = arith.constant 0 : i32
    %c0_i32_0 = arith.constant 0 : i32
    %c0_i32_1 = arith.constant 0 : i32
    return %c0_i32, %c0_i32_0 : i32, i32
  }
  func.func @transform_18(%arg0: i32) -> (i32, i32) {
    %c0_i32 = arith.constant 0 : i32
    %c0_i32_0 = arith.constant 0 : i32
    %c0_i32_1 = arith.constant 0 : i32
    return %c0_i32, %c0_i32_0 : i32, i32
  }
}

</mosaic_0001>

<llo_original>
// kernel: tpu_custom_call.1
$region0: #{tpu_custom_call.1}
  #allocation0 [shape = 'u32[]', space=smem, size = 0x4, offset = 0x4, fixed_abs, tag = 'smem constant byte address 0x4 - core index']
  #allocation1 [shape = 'u32[144,128]{1,0:T(1,128)}', space=vmem, size = 0x12000, scoped, tag = 'internal scratch']
  #allocation2 [shape = 'f32[16,32]{1,0:T(8,128)}', space=vmem, size = 0x2000, scoped, tag = 'scratch operand']
  %s0 = inlined_call_operand.hbm [shape: f32[16,32], index: 0, kind: input, shape index: {}]
  %s1 = inlined_call_operand.hbm [shape: f32[2,1,8], index: 1, kind: input, shape index: {}]
  %s2 = inlined_call_operand.vmem [shape: bf16[2,32,96], index: 2, kind: input, shape index: {}]
  %s3 = inlined_call_operand.hbm [shape: f32[2,1,96], index: 3, kind: input, shape index: {}]
  %s4 = inlined_call_operand.vmem [shape: bf16[2,32,32], index: 4, kind: input, shape index: {}]
  %s5 = inlined_call_operand.hbm [shape: f32[2,1,32], index: 5, kind: input, shape index: {}]
  %s6 = inlined_call_operand.hbm [shape: f32[2,1,32], index: 6, kind: input, shape index: {}]
  %s7 = inlined_call_operand.hbm [shape: f32[2,1,32], index: 7, kind: input, shape index: {}]
  %s8 = inlined_call_operand.hbm [shape: f32[2,1,32], index: 8, kind: input, shape index: {}]
  %s9 = inlined_call_operand.hbm [shape: f32[2,1,32], index: 9, kind: input, shape index: {}]
  %s10 = inlined_call_operand.vmem [shape: bf16[2,32,64], index: 10, kind: input, shape index: {}]
  %s11 = inlined_call_operand.hbm [shape: f32[2,1,64], index: 11, kind: input, shape index: {}]
  %s12 = inlined_call_operand.vmem [shape: bf16[2,64,32], index: 12, kind: input, shape index: {}]
  %s13 = inlined_call_operand.hbm [shape: f32[2,1,32], index: 13, kind: input, shape index: {}]
  %s14 = inlined_call_operand.vmem [shape: f32[1,32], index: 14, kind: input, shape index: {}]
  %s15 = inlined_call_operand.vmem [shape: f32[1,32], index: 15, kind: input, shape index: {}]
  %s16 = inlined_call_operand.vmem [shape: bf16[32,128], index: 16, kind: input, shape index: {}]
  %s17 = inlined_call_operand.vmem [shape: f32[1,128], index: 17, kind: input, shape index: {}]
  %s18 = inlined_call_operand.hbm [shape: f32[16,128], index: 18, kind: output, shape index: {}]
  %s19 = sld [smem:[#allocation0]]
  $region153: #{tpu_custom_call.1} parent=0
    _
  %s21 = ssub.s32 1, %s19
  %s22 = scalar_select 0, %s21, %s19
  $region1: #{tpu_custom_call.1} parent=0
    #allocation3 [shape = 'u8[8192]{0}', space=vmem, size = 0x2000, scoped, tag = 'input window, operand 0, single buffered']
    #allocation4 [shape = 's32[2]{0}', space=sflag, size = 0x8, scoped, tag = 'scoped memory for tpu_custom_call.1']
    #allocation5 [shape = 's32[2]{0}', space=sflag, size = 0x8, scoped, tag = 'scoped memory for tpu_custom_call.1']
    #allocation6 [shape = 'u8[1024]{0}', space=vmem, size = 0x400, scoped, tag = 'input window, operand 1, single buffered']
    #allocation7 [shape = 's32[1]{0}', space=sflag, size = 0x4, scoped, tag = 'scoped memory for tpu_custom_call.1']
    #allocation8 [shape = 'u8[1024]{0}', space=vmem, size = 0x400, scoped, tag = 'input window, operand 3']
    #allocation9 [shape = 'u8[1024]{0}', space=vmem, size = 0x400, scoped, tag = 'input window, operand 5']
    #allocation10 [shape = 'u8[1024]{0}', space=vmem, size = 0x400, scoped, tag = 'input window, operand 6']
    #allocation11 [shape = 'u8[1024]{0}', space=vmem, size = 0x400, scoped, tag = 'input window, operand 7']
    #allocation12 [shape = 'u8[1024]{0}', space=vmem, size = 0x400, scoped, tag = 'input window, operand 8']
    #allocation13 [shape = 'u8[1024]{0}', space=vmem, size = 0x400, scoped, tag = 'input window, operand 9']
    #allocation14 [shape = 'u8[1024]{0}', space=vmem, size = 0x400, scoped, tag = 'input window, operand 11']
    #allocation15 [shape = 'u8[1024]{0}', space=vmem, size = 0x400, scoped, tag = 'input window, operand 13']
    #allocation16 [shape = 'u8[8192]{0}', space=vmem, size = 0x2000, scoped, tag = 'output window, operand 0, single buffered']
    %23 = vsyncpa [#allocation4], 0
    %24 = vsyncpa [#allocation7], 0
    %25 = vsyncpa [#allocation5], 0
    loop: start=0, step=1, limit=4
    $region2: #{tpu_custom_call.1} parent=1 // loop_pre_header
      _
    $region3: #{tpu_custom_call.1} parent=1 // loop_header
      %s27 = sphi 0, %s31
      %p28 = scmp.ge.s32.totalorder %s27, 4
      %s35 = sphi 0, %s35
      %s37 = sphi 0, %s35
      %s38 = sphi 0, %s37
      %s52 = sphi 0, %s38
      %s56 = sphi 0, %s56
      %s58 = sphi 0, %s56
      %s59 = sphi 0, %s58
      %s73 = sphi 0, %s59
      %s79 = sphi 0, %s81
      %s82 = sphi 0, %s79
      %s83 = sphi 0, %s82
      %s99 = sphi 0, %s83
      %s105 = sphi 0, %s107
      %s108 = sphi 0, %s105
      %s109 = sphi 0, %s108
      %s125 = sphi 0, %s109
      %s131 = sphi 0, %s133
      %s134 = sphi 0, %s131
      %s135 = sphi 0, %s134
      %s151 = sphi 0, %s135
      %s157 = sphi 0, %s159
      %s160 = sphi 0, %s157
      %s161 = sphi 0, %s160
      %s177 = sphi 0, %s161
      %s183 = sphi 0, %s185
      %s186 = sphi 0, %s183
      %s187 = sphi 0, %s186
      %s203 = sphi 0, %s187
      %s209 = sphi 0, %s211
      %s212 = sphi 0, %s209
      %s213 = sphi 0, %s212
      %s229 = sphi 0, %s213
      %s235 = sphi 0, %s237
      %s238 = sphi 0, %s235
      %s239 = sphi 0, %s238
      %s255 = sphi 0, %s239
      %s261 = sphi 0, %s263
      %s264 = sphi 0, %s261
      %s265 = sphi 0, %s264
      %s281 = sphi 0, %s265
      %s287 = sphi 0, %s289
      %s290 = sphi 0, %s287
      %s291 = sphi 0, %s290
      %s307 = sphi 0, %s291
      %s313 = sphi 0, %s315
      %s316 = sphi 0, %s313
      %s317 = sphi 0, %s316
      %s333 = sphi 0, %s317
      %s339 = sphi 0, %s341
      %s342 = sphi 0, %s339
      %s343 = sphi 0, %s342
      %s359 = sphi 0, %s343
      %s365 = sphi 0, %s367
      %s368 = sphi 0, %s365
      %s369 = sphi 0, %s368
      %s385 = sphi 0, %s369
      %s389 = sphi 0, %s389
      %s391 = sphi 0, %s389
      %s392 = sphi 0, %s391
      %s406 = sphi 0, %s392
      %s410 = sphi 0, %s410
      %s412 = sphi 0, %s410
      %s413 = sphi 0, %s412
      %s427 = sphi 0, %s413
      %s431 = sphi 0, %s431
      %s433 = sphi 0, %s431
      %s434 = sphi 0, %s433
      %s448 = sphi 0, %s434
      %s452 = sphi 0, %s452
      %s454 = sphi 0, %s452
      %s455 = sphi 0, %s454
      %s469 = sphi 0, %s455
      %s473 = sphi 0, %s473
      %s475 = sphi 0, %s473
      %s476 = sphi 0, %s475
      %s490 = sphi 0, %s476
    $region4: #{tpu_custom_call.1} parent=1 // loop_header_branch
      %30 = sbr.rel (%p28) target = $region8
    $region5: #{tpu_custom_call.1} parent=1 // loop_body
      %s32 = ssub.s32 %s27, 1
      %s33 = ssub.s32 %s27, 2
      %s34 = sadd.s32 %s27, 1
      %s36 = sadd.s32 %s35, 1
      %p39 = scmp.eq.s32.totalorder %s27, 1
      %p40 = scmp.ne.s32.totalorder %s35, %s37
      %p41 = scmp.eq.s32.totalorder %s27, 0
      %p42 = por %p40, %p41
      %p43 = scmp.ne.s32.totalorder %s35, %s37
      %p44 = scmp.eq.s32.totalorder %s32, 1
      %p45 = por %p43, %p44
      %p46 = scmp.ne.s32.totalorder %s37, %s38
      %p47 = scmp.eq.s32.totalorder %s32, 0
      %p48 = por %p46, %p47
      %p49 = scmp.ne.s32.totalorder %s37, %s38
      %p50 = scmp.eq.s32.totalorder %s33, 1
      %p51 = por %p49, %p50
      %p53 = scmp.ne.s32.totalorder %s38, %s52
      %p54 = scmp.eq.s32.totalorder %s33, 0
      %p55 = por %p53, %p54
      %s57 = sadd.s32 %s56, 1
      %p60 = scmp.eq.s32.totalorder %s27, 1
      %p61 = scmp.ne.s32.totalorder %s56, %s58
      %p62 = scmp.eq.s32.totalorder %s27, 0
      %p63 = por %p61, %p62
      %p64 = scmp.ne.s32.totalorder %s56, %s58
      %p65 = scmp.eq.s32.totalorder %s32, 1
      %p66 = por %p64, %p65
      %p67 = scmp.ne.s32.totalorder %s58, %s59
      %p68 = scmp.eq.s32.totalorder %s32, 0
      %p69 = por %p67, %p68
      %p70 = scmp.ne.s32.totalorder %s58, %s59
      %p71 = scmp.eq.s32.totalorder %s33, 1
      %p72 = por %p70, %p71
      %p74 = scmp.ne.s32.totalorder %s59, %s73
      %p75 = scmp.eq.s32.totalorder %s33, 0
      %p76 = por %p74, %p75
      %s77 = ssub.s32 %s27, %s34
      %p78 = scmp.eq.s32.totalorder %s77, 0
      %s80 = sadd.s32 %s79, 1
      %s81 = scalar_select %p78, %s79, %s80
      %p84 = pneg %p78
      %p85 = scmp.eq.s32.totalorder %s27, 1
      %p86 = por %p84, %p85
      %p87 = scmp.ne.s32.totalorder %s79, %s82
      %p88 = scmp.eq.s32.totalorder %s27, 0
      %p89 = por %p87, %p88
      %p90 = scmp.ne.s32.totalorder %s79, %s82
      %p91 = scmp.eq.s32.totalorder %s32, 1
      %p92 = por %p90, %p91
      %p93 = scmp.ne.s32.totalorder %s82, %s83
      %p94 = scmp.eq.s32.totalorder %s32, 0
      %p95 = por %p93, %p94
      %p96 = scmp.ne.s32.totalorder %s82, %s83
      %p97 = scmp.eq.s32.totalorder %s33, 1
      %p98 = por %p96, %p97
      %p100 = scmp.ne.s32.totalorder %s83, %s99
      %p101 = scmp.eq.s32.totalorder %s33, 0
      %p102 = por %p100, %p101
      %s103 = ssub.s32 %s27, %s34
      %p104 = scmp.eq.s32.totalorder %s103, 0
      %s106 = sadd.s32 %s105, 1
      %s107 = scalar_select %p104, %s105, %s106
      %p110 = pneg %p104
      %p111 = scmp.eq.s32.totalorder %s27, 1
      %p112 = por %p110, %p111
      %p113 = scmp.ne.s32.totalorder %s105, %s108
      %p114 = scmp.eq.s32.totalorder %s27, 0
      %p115 = por %p113, %p114
      %p116 = scmp.ne.s32.totalorder %s105, %s108
      %p117 = scmp.eq.s32.totalorder %s32, 1
      %p118 = por %p116, %p117
      %p119 = scmp.ne.s32.totalorder %s108, %s109
      %p120 = scmp.eq.s32.totalorder %s32, 0
      %p121 = por %p119, %p120
      %p122 = scmp.ne.s32.totalorder %s108, %s109
      %p123 = scmp.eq.s32.totalorder %s33, 1
      %p124 = por %p122, %p123
      %p126 = scmp.ne.s32.totalorder %s109, %s125
      %p127 = scmp.eq.s32.totalorder %s33, 0
      %p128 = por %p126, %p127
      %s129 = ssub.s32 %s27, %s34
      %p130 = scmp.eq.s32.totalorder %s129, 0
      %s132 = sadd.s32 %s131, 1
      %s133 = scalar_select %p130, %s131, %s132
      %p136 = pneg %p130
      %p137 = scmp.eq.s32.totalorder %s27, 1
      %p138 = por %p136, %p137
      %p139 = scmp.ne.s32.totalorder %s131, %s134
      %p140 = scmp.eq.s32.totalorder %s27, 0
      %p141 = por %p139, %p140
      %p142 = scmp.ne.s32.totalorder %s131, %s134
      %p143 = scmp.eq.s32.totalorder %s32, 1
      %p144 = por %p142, %p143
      %p145 = scmp.ne.s32.totalorder %s134, %s135
      %p146 = scmp.eq.s32.totalorder %s32, 0
      %p147 = por %p145, %p146
      %p148 = scmp.ne.s32.totalorder %s134, %s135
      %p149 = scmp.eq.s32.totalorder %s33, 1
      %p150 = por %p148, %p149
      %p152 = scmp.ne.s32.totalorder %s135, %s151
      %p153 = scmp.eq.s32.totalorder %s33, 0
      %p154 = por %p152, %p153
      %s155 = ssub.s32 %s27, %s34
      %p156 = scmp.eq.s32.totalorder %s155, 0
      %s158 = sadd.s32 %s157, 1
      %s159 = scalar_select %p156, %s157, %s158
      %p162 = pneg %p156
      %p163 = scmp.eq.s32.totalorder %s27, 1
      %p164 = por %p162, %p163
      %p165 = scmp.ne.s32.totalorder %s157, %s160
      %p166 = scmp.eq.s32.totalorder %s27, 0
      %p167 = por %p165, %p166
      %p168 = scmp.ne.s32.totalorder %s157, %s160
      %p169 = scmp.eq.s32.totalorder %s32, 1
      %p170 = por %p168, %p169
      %p171 = scmp.ne.s32.totalorder %s160, %s161
      %p172 = scmp.eq.s32.totalorder %s32, 0
      %p173 = por %p171, %p172
      %p174 = scmp.ne.s32.totalorder %s160, %s161
      %p175 = scmp.eq.s32.totalorder %s33, 1
      %p176 = por %p174, %p175
      %p178 = scmp.ne.s32.totalorder %s161, %s177
      %p179 = scmp.eq.s32.totalorder %s33, 0
      %p180 = por %p178, %p179
      %s181 = ssub.s32 %s27, %s34
      %p182 = scmp.eq.s32.totalorder %s181, 0
      %s184 = sadd.s32 %s183, 1
      %s185 = scalar_select %p182, %s183, %s184
      %p188 = pneg %p182
      %p189 = scmp.eq.s32.totalorder %s27, 1
      %p190 = por %p188, %p189
      %p191 = scmp.ne.s32.totalorder %s183, %s186
      %p192 = scmp.eq.s32.totalorder %s27, 0
      %p193 = por %p191, %p192
      %p194 = scmp.ne.s32.totalorder %s183, %s186
      %p195 = scmp.eq.s32.totalorder %s32, 1
      %p196 = por %p194, %p195
      %p197 = scmp.ne.s32.totalorder %s186, %s187
      %p198 = scmp.eq.s32.totalorder %s32, 0
      %p199 = por %p197, %p198
      %p200 = scmp.ne.s32.totalorder %s186, %s187
      %p201 = scmp.eq.s32.totalorder %s33, 1
      %p202 = por %p200, %p201
      %p204 = scmp.ne.s32.totalorder %s187, %s203
      %p205 = scmp.eq.s32.totalorder %s33, 0
      %p206 = por %p204, %p205
      %s207 = ssub.s32 %s27, %s34
      %p208 = scmp.eq.s32.totalorder %s207, 0
      %s210 = sadd.s32 %s209, 1
      %s211 = scalar_select %p208, %s209, %s210
      %p214 = pneg %p208
      %p215 = scmp.eq.s32.totalorder %s27, 1
      %p216 = por %p214, %p215
      %p217 = scmp.ne.s32.totalorder %s209, %s212
      %p218 = scmp.eq.s32.totalorder %s27, 0
      %p219 = por %p217, %p218
      %p220 = scmp.ne.s32.totalorder %s209, %s212
      %p221 = scmp.eq.s32.totalorder %s32, 1
      %p222 = por %p220, %p221
      %p223 = scmp.ne.s32.totalorder %s212, %s213
      %p224 = scmp.eq.s32.totalorder %s32, 0
      %p225 = por %p223, %p224
      %p226 = scmp.ne.s32.totalorder %s212, %s213
      %p227 = scmp.eq.s32.totalorder %s33, 1
      %p228 = por %p226, %p227
      %p230 = scmp.ne.s32.totalorder %s213, %s229
      %p231 = scmp.eq.s32.totalorder %s33, 0
      %p232 = por %p230, %p231
      %s233 = ssub.s32 %s27, %s34
      %p234 = scmp.eq.s32.totalorder %s233, 0
      %s236 = sadd.s32 %s235, 1
      %s237 = scalar_select %p234, %s235, %s236
      %p240 = pneg %p234
      %p241 = scmp.eq.s32.totalorder %s27, 1
      %p242 = por %p240, %p241
      %p243 = scmp.ne.s32.totalorder %s235, %s238
      %p244 = scmp.eq.s32.totalorder %s27, 0
      %p245 = por %p243, %p244
      %p246 = scmp.ne.s32.totalorder %s235, %s238
      %p247 = scmp.eq.s32.totalorder %s32, 1
      %p248 = por %p246, %p247
      %p249 = scmp.ne.s32.totalorder %s238, %s239
      %p250 = scmp.eq.s32.totalorder %s32, 0
      %p251 = por %p249, %p250
      %p252 = scmp.ne.s32.totalorder %s238, %s239
      %p253 = scmp.eq.s32.totalorder %s33, 1
      %p254 = por %p252, %p253
      %p256 = scmp.ne.s32.totalorder %s239, %s255
      %p257 = scmp.eq.s32.totalorder %s33, 0
      %p258 = por %p256, %p257
      %s259 = ssub.s32 %s27, %s34
      %p260 = scmp.eq.s32.totalorder %s259, 0
      %s262 = sadd.s32 %s261, 1
      %s263 = scalar_select %p260, %s261, %s262
      %p266 = pneg %p260
      %p267 = scmp.eq.s32.totalorder %s27, 1
      %p268 = por %p266, %p267
      %p269 = scmp.ne.s32.totalorder %s261, %s264
      %p270 = scmp.eq.s32.totalorder %s27, 0
      %p271 = por %p269, %p270
      %p272 = scmp.ne.s32.totalorder %s261, %s264
      %p273 = scmp.eq.s32.totalorder %s32, 1
      %p274 = por %p272, %p273
      %p275 = scmp.ne.s32.totalorder %s264, %s265
      %p276 = scmp.eq.s32.totalorder %s32, 0
      %p277 = por %p275, %p276
      %p278 = scmp.ne.s32.totalorder %s264, %s265
      %p279 = scmp.eq.s32.totalorder %s33, 1
      %p280 = por %p278, %p279
      %p282 = scmp.ne.s32.totalorder %s265, %s281
      %p283 = scmp.eq.s32.totalorder %s33, 0
      %p284 = por %p282, %p283
      %s285 = ssub.s32 %s27, %s34
      %p286 = scmp.eq.s32.totalorder %s285, 0
      %s288 = sadd.s32 %s287, 1
      %s289 = scalar_select %p286, %s287, %s288
      %p292 = pneg %p286
      %p293 = scmp.eq.s32.totalorder %s27, 1
      %p294 = por %p292, %p293
      %p295 = scmp.ne.s32.totalorder %s287, %s290
      %p296 = scmp.eq.s32.totalorder %s27, 0
      %p297 = por %p295, %p296
      %p298 = scmp.ne.s32.totalorder %s287, %s290
      %p299 = scmp.eq.s32.totalorder %s32, 1
      %p300 = por %p298, %p299
      %p301 = scmp.ne.s32.totalorder %s290, %s291
      %p302 = scmp.eq.s32.totalorder %s32, 0
      %p303 = por %p301, %p302
      %p304 = scmp.ne.s32.totalorder %s290, %s291
      %p305 = scmp.eq.s32.totalorder %s33, 1
      %p306 = por %p304, %p305
      %p308 = scmp.ne.s32.totalorder %s291, %s307
      %p309 = scmp.eq.s32.totalorder %s33, 0
      %p310 = por %p308, %p309
      %s311 = ssub.s32 %s27, %s34
      %p312 = scmp.eq.s32.totalorder %s311, 0
      %s314 = sadd.s32 %s313, 1
      %s315 = scalar_select %p312, %s313, %s314
      %p318 = pneg %p312
      %p319 = scmp.eq.s32.totalorder %s27, 1
      %p320 = por %p318, %p319
      %p321 = scmp.ne.s32.totalorder %s313, %s316
      %p322 = scmp.eq.s32.totalorder %s27, 0
      %p323 = por %p321, %p322
      %p324 = scmp.ne.s32.totalorder %s313, %s316
      %p325 = scmp.eq.s32.totalorder %s32, 1
      %p326 = por %p324, %p325
      %p327 = scmp.ne.s32.totalorder %s316, %s317
      %p328 = scmp.eq.s32.totalorder %s32, 0
      %p329 = por %p327, %p328
      %p330 = scmp.ne.s32.totalorder %s316, %s317
      %p331 = scmp.eq.s32.totalorder %s33, 1
      %p332 = por %p330, %p331
      %p334 = scmp.ne.s32.totalorder %s317, %s333
      %p335 = scmp.eq.s32.totalorder %s33, 0
      %p336 = por %p334, %p335
      %s337 = ssub.s32 %s27, %s34
      %p338 = scmp.eq.s32.totalorder %s337, 0
      %s340 = sadd.s32 %s339, 1
      %s341 = scalar_select %p338, %s339, %s340
      %p344 = pneg %p338
      %p345 = scmp.eq.s32.totalorder %s27, 1
      %p346 = por %p344, %p345
      %p347 = scmp.ne.s32.totalorder %s339, %s342
      %p348 = scmp.eq.s32.totalorder %s27, 0
      %p349 = por %p347, %p348
      %p350 = scmp.ne.s32.totalorder %s339, %s342
      %p351 = scmp.eq.s32.totalorder %s32, 1
      %p352 = por %p350, %p351
      %p353 = scmp.ne.s32.totalorder %s342, %s343
      %p354 = scmp.eq.s32.totalorder %s32, 0
      %p355 = por %p353, %p354
      %p356 = scmp.ne.s32.totalorder %s342, %s343
      %p357 = scmp.eq.s32.totalorder %s33, 1
      %p358 = por %p356, %p357
      %p360 = scmp.ne.s32.totalorder %s343, %s359
      %p361 = scmp.eq.s32.totalorder %s33, 0
      %p362 = por %p360, %p361
      %s363 = ssub.s32 %s27, %s34
      %p364 = scmp.eq.s32.totalorder %s363, 0
      %s366 = sadd.s32 %s365, 1
      %s367 = scalar_select %p364, %s365, %s366
      %p370 = pneg %p364
      %p371 = scmp.eq.s32.totalorder %s27, 1
      %p372 = por %p370, %p371
      %p373 = scmp.ne.s32.totalorder %s365, %s368
      %p374 = scmp.eq.s32.totalorder %s27, 0
      %p375 = por %p373, %p374
      %p376 = scmp.ne.s32.totalorder %s365, %s368
      %p377 = scmp.eq.s32.totalorder %s32, 1
      %p378 = por %p376, %p377
      %p379 = scmp.ne.s32.totalorder %s368, %s369
      %p380 = scmp.eq.s32.totalorder %s32, 0
      %p381 = por %p379, %p380
      %p382 = scmp.ne.s32.totalorder %s368, %s369
      %p383 = scmp.eq.s32.totalorder %s33, 1
      %p384 = por %p382, %p383
      %p386 = scmp.ne.s32.totalorder %s369, %s385
      %p387 = scmp.eq.s32.totalorder %s33, 0
      %p388 = por %p386, %p387
      %s390 = sadd.s32 %s389, 1
      %p393 = scmp.eq.s32.totalorder %s27, 1
      %p394 = scmp.ne.s32.totalorder %s389, %s391
      %p395 = scmp.eq.s32.totalorder %s27, 0
      %p396 = por %p394, %p395
      %p397 = scmp.ne.s32.totalorder %s389, %s391
      %p398 = scmp.eq.s32.totalorder %s32, 1
      %p399 = por %p397, %p398
      %p400 = scmp.ne.s32.totalorder %s391, %s392
      %p401 = scmp.eq.s32.totalorder %s32, 0
      %p402 = por %p400, %p401
      %p403 = scmp.ne.s32.totalorder %s391, %s392
      %p404 = scmp.eq.s32.totalorder %s33, 1
      %p405 = por %p403, %p404
      %p407 = scmp.ne.s32.totalorder %s392, %s406
      %p408 = scmp.eq.s32.totalorder %s33, 0
      %p409 = por %p407, %p408
      %s411 = sadd.s32 %s410, 1
      %p414 = scmp.eq.s32.totalorder %s27, 1
      %p415 = scmp.ne.s32.totalorder %s410, %s412
      %p416 = scmp.eq.s32.totalorder %s27, 0
      %p417 = por %p415, %p416
      %p418 = scmp.ne.s32.totalorder %s410, %s412
      %p419 = scmp.eq.s32.totalorder %s32, 1
      %p420 = por %p418, %p419
      %p421 = scmp.ne.s32.totalorder %s412, %s413
      %p422 = scmp.eq.s32.totalorder %s32, 0
      %p423 = por %p421, %p422
      %p424 = scmp.ne.s32.totalorder %s412, %s413
      %p425 = scmp.eq.s32.totalorder %s33, 1
      %p426 = por %p424, %p425
      %p428 = scmp.ne.s32.totalorder %s413, %s427
      %p429 = scmp.eq.s32.totalorder %s33, 0
      %p430 = por %p428, %p429
      %s432 = sadd.s32 %s431, 1
      %p435 = scmp.eq.s32.totalorder %s27, 1
      %p436 = scmp.ne.s32.totalorder %s431, %s433
      %p437 = scmp.eq.s32.totalorder %s27, 0
      %p438 = por %p436, %p437
      %p439 = scmp.ne.s32.totalorder %s431, %s433
      %p440 = scmp.eq.s32.totalorder %s32, 1
      %p441 = por %p439, %p440
      %p442 = scmp.ne.s32.totalorder %s433, %s434
      %p443 = scmp.eq.s32.totalorder %s32, 0
      %p444 = por %p442, %p443
      %p445 = scmp.ne.s32.totalorder %s433, %s434
      %p446 = scmp.eq.s32.totalorder %s33, 1
      %p447 = por %p445, %p446
      %p449 = scmp.ne.s32.totalorder %s434, %s448
      %p450 = scmp.eq.s32.totalorder %s33, 0
      %p451 = por %p449, %p450
      %s453 = sadd.s32 %s452, 1
      %p456 = scmp.eq.s32.totalorder %s27, 1
      %p457 = scmp.ne.s32.totalorder %s452, %s454
      %p458 = scmp.eq.s32.totalorder %s27, 0
      %p459 = por %p457, %p458
      %p460 = scmp.ne.s32.totalorder %s452, %s454
      %p461 = scmp.eq.s32.totalorder %s32, 1
      %p462 = por %p460, %p461
      %p463 = scmp.ne.s32.totalorder %s454, %s455
      %p464 = scmp.eq.s32.totalorder %s32, 0
      %p465 = por %p463, %p464
      %p466 = scmp.ne.s32.totalorder %s454, %s455
      %p467 = scmp.eq.s32.totalorder %s33, 1
      %p468 = por %p466, %p467
      %p470 = scmp.ne.s32.totalorder %s455, %s469
      %p471 = scmp.eq.s32.totalorder %s33, 0
      %p472 = por %p470, %p471
      %s474 = sadd.s32 %s473, 1
      %p477 = scmp.eq.s32.totalorder %s27, 1
      %p478 = scmp.ne.s32.totalorder %s473, %s475
      %p479 = scmp.eq.s32.totalorder %s27, 0
      %p480 = por %p478, %p479
      %p481 = scmp.ne.s32.totalorder %s473, %s475
      %p482 = scmp.eq.s32.totalorder %s32, 1
      %p483 = por %p481, %p482
      %p484 = scmp.ne.s32.totalorder %s475, %s476
      %p485 = scmp.eq.s32.totalorder %s32, 0
      %p486 = por %p484, %p485
      %p487 = scmp.ne.s32.totalorder %s475, %s476
      %p488 = scmp.eq.s32.totalorder %s33, 1
      %p489 = por %p487, %p488
      %p491 = scmp.ne.s32.totalorder %s476, %s490
      %p492 = scmp.eq.s32.totalorder %s33, 0
      %p493 = por %p491, %p492
      %p494 = scmp.le.s32.totalorder 1, %s27
      %p495 = scmp.lt.s32.totalorder %s27, 3
      %p496 = pnand %p494, %p495
      %p497 = pneg %p496
      // Predicated region
      $region9: #{tpu_custom_call.1} parent=5 // pred_check
        _
      $region10: #{tpu_custom_call.1} parent=5 // pred_check_branch
        %499 = sbr.rel (%p496) target = $region12
      $region11: #{tpu_custom_call.1} parent=5 // pred_region
        %s500 = ssub.s32 %s27, 1
        // Predicated region
        $region13: #{tpu_custom_call.1} parent=11 // pred_check
          %p501 = pneg %p48
        $region14: #{tpu_custom_call.1} parent=11 // pred_check_branch
          %503 = sbr.rel (%p501) target = $region16
        $region15: #{tpu_custom_call.1} parent=11 // pred_region
          %s505 = ssub.s32 256, 256
          %506 = vsyncadd [#allocation4], %s505
          %s507 = sshll.u32 [#allocation3], 4
          %s508 = int_to_ptr.vmem [resolvable:$true] %s507
          %513 = dma.hbm_to_vmem [thread:$0]  %s0, 256, %s508, [#allocation4], 128, 128, 8
        $region16: #{tpu_custom_call.1} parent=11 // pred_fallthru
          _
        // Predicated region
        $region17: #{tpu_custom_call.1} parent=11 // pred_check
          %p514 = pneg %p69
        $region18: #{tpu_custom_call.1} parent=11 // pred_check_branch
          %516 = sbr.rel (%p514) target = $region20
        $region19: #{tpu_custom_call.1} parent=11 // pred_region
          %s518 = ssub.s32 32, 32
          %519 = vsyncadd [#allocation7], %s518
          %s520 = sshll.u32 [#allocation6], 4
          %s521 = int_to_ptr.vmem [resolvable:$true] %s520
          %526 = dma.hbm_to_vmem [thread:$0]  %s1, 32, %s521, [#allocation7], 16, 16, 1
        $region20: #{tpu_custom_call.1} parent=11 // pred_fallthru
          _
        // Predicated region
        $region21: #{tpu_custom_call.1} parent=11 // pred_check
          %p527 = pneg %p402
        $region22: #{tpu_custom_call.1} parent=11 // pred_check_branch
          %529 = sbr.rel (%p527) target = $region24
        $region23: #{tpu_custom_call.1} parent=11 // pred_region
          _
        $region24: #{tpu_custom_call.1} parent=11 // pred_fallthru
          _
        // Predicated region
        $region25: #{tpu_custom_call.1} parent=11 // pred_check
          %p530 = pneg %p423
        $region26: #{tpu_custom_call.1} parent=11 // pred_check_branch
          %532 = sbr.rel (%p530) target = $region28
        $region27: #{tpu_custom_call.1} parent=11 // pred_region
          _
        $region28: #{tpu_custom_call.1} parent=11 // pred_fallthru
          _
        // Predicated region
        $region29: #{tpu_custom_call.1} parent=11 // pred_check
          %p533 = pneg %p444
        $region30: #{tpu_custom_call.1} parent=11 // pred_check_branch
          %535 = sbr.rel (%p533) target = $region32
        $region31: #{tpu_custom_call.1} parent=11 // pred_region
          _
        $region32: #{tpu_custom_call.1} parent=11 // pred_fallthru
          _
        // Predicated region
        $region33: #{tpu_custom_call.1} parent=11 // pred_check
          %p536 = pneg %p465
        $region34: #{tpu_custom_call.1} parent=11 // pred_check_branch
          %538 = sbr.rel (%p536) target = $region36
        $region35: #{tpu_custom_call.1} parent=11 // pred_region
          _
        $region36: #{tpu_custom_call.1} parent=11 // pred_fallthru
          _
      $region12: #{tpu_custom_call.1} parent=5 // pred_fallthru
        _
      %p539 = scmp.lt.s32.totalorder %s27, 2
      // Predicated region
      $region37: #{tpu_custom_call.1} parent=5 // pred_check
        %p540 = pneg %p539
      $region38: #{tpu_custom_call.1} parent=5 // pred_check_branch
        %542 = sbr.rel (%p540) target = $region40
      $region39: #{tpu_custom_call.1} parent=5 // pred_region
        // Predicated region
        $region41: #{tpu_custom_call.1} parent=39 // pred_check
          %p543 = pneg %p89
        $region42: #{tpu_custom_call.1} parent=39 // pred_check_branch
          %545 = sbr.rel (%p543) target = $region44
        $region43: #{tpu_custom_call.1} parent=39 // pred_region
          %p546 = scmp.lt.s32.totalorder %s27, 1
          %s547 = scalar_select %p546, %s27, 1
          %s548 = smul.addr %s547, 4
          %s549 = smul.addr %s548, 4
          %s550 = scalar_lea.vmem %s2, %s549
        $region44: #{tpu_custom_call.1} parent=39 // pred_fallthru
          _
        // Predicated region
        $region45: #{tpu_custom_call.1} parent=39 // pred_check
          %p551 = pneg %p115
        $region46: #{tpu_custom_call.1} parent=39 // pred_check_branch
          %553 = sbr.rel (%p551) target = $region48
        $region47: #{tpu_custom_call.1} parent=39 // pred_region
          %s554 = sand.u32 %s27, 1
          %s555 = scalar_lea.sflag [#allocation4], %s554
          %s556 = sand.u32 %s105, 1
          %s557 = scalar_lea.vmem [#allocation8], %s556
          %s559 = ssub.s32 16, 16
          %560 = vsyncadd %s555, %s559
          %s561 = smul.addr %s27, 16
          %s562 = scalar_lea.hbm %s3, %s561
          %s564 = sshll.u32 %s557, 4
          %s565 = int_to_ptr.vmem [resolvable:$true] %s564
          %567 = dma.hbm_to_vmem [thread:$0]  %s562, 16, %s565, %s555
        $region48: #{tpu_custom_call.1} parent=39 // pred_fallthru
          _
        // Predicated region
        $region49: #{tpu_custom_call.1} parent=39 // pred_check
          %p568 = pneg %p141
        $region50: #{tpu_custom_call.1} parent=39 // pred_check_branch
          %570 = sbr.rel (%p568) target = $region52
        $region51: #{tpu_custom_call.1} parent=39 // pred_region
          %p571 = scmp.lt.s32.totalorder %s27, 1
          %s572 = scalar_select %p571, %s27, 1
          %s573 = smul.addr %s572, 4
          %s574 = smul.addr %s573, 4
          %s575 = scalar_lea.vmem %s4, %s574
        $region52: #{tpu_custom_call.1} parent=39 // pred_fallthru
          _
        // Predicated region
        $region53: #{tpu_custom_call.1} parent=39 // pred_check
          %p576 = pneg %p167
        $region54: #{tpu_custom_call.1} parent=39 // pred_check_branch
          %578 = sbr.rel (%p576) target = $region56
        $region55: #{tpu_custom_call.1} parent=39 // pred_region
          %s579 = sand.u32 %s27, 1
          %s580 = scalar_lea.sflag [#allocation4], %s579
          %s581 = sand.u32 %s157, 1
          %s582 = scalar_lea.vmem [#allocation9], %s581
          %s584 = ssub.s32 16, 16
          %585 = vsyncadd %s580, %s584
          %s586 = smul.addr %s27, 16
          %s587 = scalar_lea.hbm %s5, %s586
          %s589 = sshll.u32 %s582, 4
          %s590 = int_to_ptr.vmem [resolvable:$true] %s589
          %592 = dma.hbm_to_vmem [thread:$0]  %s587, 16, %s590, %s580
        $region56: #{tpu_custom_call.1} parent=39 // pred_fallthru
          _
        // Predicated region
        $region57: #{tpu_custom_call.1} parent=39 // pred_check
          %p593 = pneg %p193
        $region58: #{tpu_custom_call.1} parent=39 // pred_check_branch
          %595 = sbr.rel (%p593) target = $region60
        $region59: #{tpu_custom_call.1} parent=39 // pred_region
          %s596 = sand.u32 %s27, 1
          %s597 = scalar_lea.sflag [#allocation4], %s596
          %s598 = sand.u32 %s183, 1
          %s599 = scalar_lea.vmem [#allocation10], %s598
          %s601 = ssub.s32 16, 16
          %602 = vsyncadd %s597, %s601
          %s603 = smul.addr %s27, 16
          %s604 = scalar_lea.hbm %s6, %s603
          %s606 = sshll.u32 %s599, 4
          %s607 = int_to_ptr.vmem [resolvable:$true] %s606
          %609 = dma.hbm_to_vmem [thread:$0]  %s604, 16, %s607, %s597
        $region60: #{tpu_custom_call.1} parent=39 // pred_fallthru
          _
        // Predicated region
        $region61: #{tpu_custom_call.1} parent=39 // pred_check
          %p610 = pneg %p219
        $region62: #{tpu_custom_call.1} parent=39 // pred_check_branch
          %612 = sbr.rel (%p610) target = $region64
        $region63: #{tpu_custom_call.1} parent=39 // pred_region
          %s613 = sand.u32 %s27, 1
          %s614 = scalar_lea.sflag [#allocation4], %s613
          %s615 = sand.u32 %s209, 1
          %s616 = scalar_lea.vmem [#allocation11], %s615
          %s618 = ssub.s32 16, 16
          %619 = vsyncadd %s614, %s618
          %s620 = smul.addr %s27, 16
          %s621 = scalar_lea.hbm %s7, %s620
          %s623 = sshll.u32 %s616, 4
          %s624 = int_to_ptr.vmem [resolvable:$true] %s623
          %626 = dma.hbm_to_vmem [thread:$0]  %s621, 16, %s624, %s614
        $region64: #{tpu_custom_call.1} parent=39 // pred_fallthru
          _
        // Predicated region
        $region65: #{tpu_custom_call.1} parent=39 // pred_check
          %p627 = pneg %p245
        $region66: #{tpu_custom_call.1} parent=39 // pred_check_branch
          %629 = sbr.rel (%p627) target = $region68
        $region67: #{tpu_custom_call.1} parent=39 // pred_region
          %s630 = sand.u32 %s27, 1
          %s631 = scalar_lea.sflag [#allocation4], %s630
          %s632 = sand.u32 %s235, 1
          %s633 = scalar_lea.vmem [#allocation12], %s632
          %s635 = ssub.s32 16, 16
          %636 = vsyncadd %s631, %s635
          %s637 = smul.addr %s27, 16
          %s638 = scalar_lea.hbm %s8, %s637
          %s640 = sshll.u32 %s633, 4
          %s641 = int_to_ptr.vmem [resolvable:$true] %s640
          %643 = dma.hbm_to_vmem [thread:$0]  %s638, 16, %s641, %s631
        $region68: #{tpu_custom_call.1} parent=39 // pred_fallthru
          _
        // Predicated region
        $region69: #{tpu_custom_call.1} parent=39 // pred_check
          %p644 = pneg %p271
        $region70: #{tpu_custom_call.1} parent=39 // pred_check_branch
          %646 = sbr.rel (%p644) target = $region72
        $region71: #{tpu_custom_call.1} parent=39 // pred_region
          %s647 = sand.u32 %s27, 1
          %s648 = scalar_lea.sflag [#allocation4], %s647
          %s649 = sand.u32 %s261, 1
          %s650 = scalar_lea.vmem [#allocation13], %s649
          %s652 = ssub.s32 16, 16
          %653 = vsyncadd %s648, %s652
          %s654 = smul.addr %s27, 16
          %s655 = scalar_lea.hbm %s9, %s654
          %s657 = sshll.u32 %s650, 4
          %s658 = int_to_ptr.vmem [resolvable:$true] %s657
          %660 = dma.hbm_to_vmem [thread:$0]  %s655, 16, %s658, %s648
        $region72: #{tpu_custom_call.1} parent=39 // pred_fallthru
          _
        // Predicated region
        $region73: #{tpu_custom_call.1} parent=39 // pred_check
          %p661 = pneg %p297
        $region74: #{tpu_custom_call.1} parent=39 // pred_check_branch
          %663 = sbr.rel (%p661) target = $region76
        $region75: #{tpu_custom_call.1} parent=39 // pred_region
          %p664 = scmp.lt.s32.totalorder %s27, 1
          %s665 = scalar_select %p664, %s27, 1
          %s666 = smul.addr %s665, 4
          %s667 = smul.addr %s666, 4
          %s668 = scalar_lea.vmem %s10, %s667
        $region76: #{tpu_custom_call.1} parent=39 // pred_fallthru
          _
        // Predicated region
        $region77: #{tpu_custom_call.1} parent=39 // pred_check
          %p669 = pneg %p323
        $region78: #{tpu_custom_call.1} parent=39 // pred_check_branch
          %671 = sbr.rel (%p669) target = $region80
        $region79: #{tpu_custom_call.1} parent=39 // pred_region
          %s672 = sand.u32 %s27, 1
          %s673 = scalar_lea.sflag [#allocation4], %s672
          %s674 = sand.u32 %s313, 1
          %s675 = scalar_lea.vmem [#allocation14], %s674
          %s677 = ssub.s32 16, 16
          %678 = vsyncadd %s673, %s677
          %s679 = smul.addr %s27, 16
          %s680 = scalar_lea.hbm %s11, %s679
          %s682 = sshll.u32 %s675, 4
          %s683 = int_to_ptr.vmem [resolvable:$true] %s682
          %685 = dma.hbm_to_vmem [thread:$0]  %s680, 16, %s683, %s673
        $region80: #{tpu_custom_call.1} parent=39 // pred_fallthru
          _
        // Predicated region
        $region81: #{tpu_custom_call.1} parent=39 // pred_check
          %p686 = pneg %p349
        $region82: #{tpu_custom_call.1} parent=39 // pred_check_branch
          %688 = sbr.rel (%p686) target = $region84
        $region83: #{tpu_custom_call.1} parent=39 // pred_region
          %p689 = scmp.lt.s32.totalorder %s27, 1
          %s690 = scalar_select %p689, %s27, 1
          %s691 = smul.addr %s690, 8
          %s692 = smul.addr %s691, 4
          %s693 = scalar_lea.vmem %s12, %s692
        $region84: #{tpu_custom_call.1} parent=39 // pred_fallthru
          _
        // Predicated region
        $region85: #{tpu_custom_call.1} parent=39 // pred_check
          %p694 = pneg %p375
        $region86: #{tpu_custom_call.1} parent=39 // pred_check_branch
          %696 = sbr.rel (%p694) target = $region88
        $region87: #{tpu_custom_call.1} parent=39 // pred_region
          %s697 = sand.u32 %s27, 1
          %s698 = scalar_lea.sflag [#allocation4], %s697
          %s699 = sand.u32 %s365, 1
          %s700 = scalar_lea.vmem [#allocation15], %s699
          %s702 = ssub.s32 16, 16
          %703 = vsyncadd %s698, %s702
          %s704 = smul.addr %s27, 16
          %s705 = scalar_lea.hbm %s13, %s704
          %s707 = sshll.u32 %s700, 4
          %s708 = int_to_ptr.vmem [resolvable:$true] %s707
          %710 = dma.hbm_to_vmem [thread:$0]  %s705, 16, %s708, %s698
        $region88: #{tpu_custom_call.1} parent=39 // pred_fallthru
          _
      $region40: #{tpu_custom_call.1} parent=5 // pred_fallthru
        _
      %p711 = scmp.le.s32.totalorder 1, %s27
      %p712 = scmp.lt.s32.totalorder %s27, 3
      %p713 = pnand %p711, %p712
      %p714 = pneg %p713
      // Predicated region
      $region89: #{tpu_custom_call.1} parent=5 // pred_check
        _
      $region90: #{tpu_custom_call.1} parent=5 // pred_check_branch
        %716 = sbr.rel (%p713) target = $region92
      $region91: #{tpu_custom_call.1} parent=5 // pred_region
        %s717 = ssub.s32 %s27, 1
        // Predicated region
        $region93: #{tpu_custom_call.1} parent=91 // pred_check
          %p718 = pneg %p48
        $region94: #{tpu_custom_call.1} parent=91 // pred_check_branch
          %720 = sbr.rel (%p718) target = $region96
        $region95: #{tpu_custom_call.1} parent=91 // pred_region
          %721 = dma.done [#allocation4], 256
        $region96: #{tpu_custom_call.1} parent=91 // pred_fallthru
          _
        // Predicated region
        $region97: #{tpu_custom_call.1} parent=91 // pred_check
          %p722 = pneg %p69
        $region98: #{tpu_custom_call.1} parent=91 // pred_check_branch
          %724 = sbr.rel (%p722) target = $region100
        $region99: #{tpu_custom_call.1} parent=91 // pred_region
          %725 = dma.done [#allocation7], 32
        $region100: #{tpu_custom_call.1} parent=91 // pred_fallthru
          _
        %s726 = sand.u32 %s32, 1
        %s727 = scalar_lea.sflag [#allocation4], %s726
        %s728 = sand.u32 %s108, 1
        %s729 = scalar_lea.vmem [#allocation8], %s728
        // Predicated region
        $region101: #{tpu_custom_call.1} parent=91 // pred_check
          %p730 = pneg %p121
        $region102: #{tpu_custom_call.1} parent=91 // pred_check_branch
          %732 = sbr.rel (%p730) target = $region104
        $region103: #{tpu_custom_call.1} parent=91 // pred_region
          %733 = dma.done %s727, 16
        $region104: #{tpu_custom_call.1} parent=91 // pred_fallthru
          _
        %s734 = sand.u32 %s32, 1
        %s735 = scalar_lea.sflag [#allocation4], %s734
        %s736 = sand.u32 %s160, 1
        %s737 = scalar_lea.vmem [#allocation9], %s736
        // Predicated region
        $region105: #{tpu_custom_call.1} parent=91 // pred_check
          %p738 = pneg %p173
        $region106: #{tpu_custom_call.1} parent=91 // pred_check_branch
          %740 = sbr.rel (%p738) target = $region108
        $region107: #{tpu_custom_call.1} parent=91 // pred_region
          %741 = dma.done %s735, 16
        $region108: #{tpu_custom_call.1} parent=91 // pred_fallthru
          _
        %s742 = sand.u32 %s32, 1
        %s743 = scalar_lea.sflag [#allocation4], %s742
        %s744 = sand.u32 %s186, 1
        %s745 = scalar_lea.vmem [#allocation10], %s744
        // Predicated region
        $region109: #{tpu_custom_call.1} parent=91 // pred_check
          %p746 = pneg %p199
        $region110: #{tpu_custom_call.1} parent=91 // pred_check_branch
          %748 = sbr.rel (%p746) target = $region112
        $region111: #{tpu_custom_call.1} parent=91 // pred_region
          %749 = dma.done %s743, 16
        $region112: #{tpu_custom_call.1} parent=91 // pred_fallthru
          _
        %s750 = sand.u32 %s32, 1
        %s751 = scalar_lea.sflag [#allocation4], %s750
        %s752 = sand.u32 %s212, 1
        %s753 = scalar_lea.vmem [#allocation11], %s752
        // Predicated region
        $region113: #{tpu_custom_call.1} parent=91 // pred_check
          %p754 = pneg %p225
        $region114: #{tpu_custom_call.1} parent=91 // pred_check_branch
          %756 = sbr.rel (%p754) target = $region116
        $region115: #{tpu_custom_call.1} parent=91 // pred_region
          %757 = dma.done %s751, 16
        $region116: #{tpu_custom_call.1} parent=91 // pred_fallthru
          _
        %s758 = sand.u32 %s32, 1
        %s759 = scalar_lea.sflag [#allocation4], %s758
        %s760 = sand.u32 %s238, 1
        %s761 = scalar_lea.vmem [#allocation12], %s760
        // Predicated region
        $region117: #{tpu_custom_call.1} parent=91 // pred_check
          %p762 = pneg %p251
        $region118: #{tpu_custom_call.1} parent=91 // pred_check_branch
          %764 = sbr.rel (%p762) target = $region120
        $region119: #{tpu_custom_call.1} parent=91 // pred_region
          %765 = dma.done %s759, 16
        $region120: #{tpu_custom_call.1} parent=91 // pred_fallthru
          _
        %s766 = sand.u32 %s32, 1
        %s767 = scalar_lea.sflag [#allocation4], %s766
        %s768 = sand.u32 %s264, 1
        %s769 = scalar_lea.vmem [#allocation13], %s768
        // Predicated region
        $region121: #{tpu_custom_call.1} parent=91 // pred_check
          %p770 = pneg %p277
        $region122: #{tpu_custom_call.1} parent=91 // pred_check_branch
          %772 = sbr.rel (%p770) target = $region124
        $region123: #{tpu_custom_call.1} parent=91 // pred_region
          %773 = dma.done %s767, 16
        $region124: #{tpu_custom_call.1} parent=91 // pred_fallthru
          _
        %s774 = sand.u32 %s32, 1
        %s775 = scalar_lea.sflag [#allocation4], %s774
        %s776 = sand.u32 %s316, 1
        %s777 = scalar_lea.vmem [#allocation14], %s776
        // Predicated region
        $region125: #{tpu_custom_call.1} parent=91 // pred_check
          %p778 = pneg %p329
        $region126: #{tpu_custom_call.1} parent=91 // pred_check_branch
          %780 = sbr.rel (%p778) target = $region128
        $region127: #{tpu_custom_call.1} parent=91 // pred_region
          %781 = dma.done %s775, 16
        $region128: #{tpu_custom_call.1} parent=91 // pred_fallthru
          _
        %s782 = sand.u32 %s32, 1
        %s783 = scalar_lea.sflag [#allocation4], %s782
        %s784 = sand.u32 %s368, 1
        %s785 = scalar_lea.vmem [#allocation15], %s784
        // Predicated region
        $region129: #{tpu_custom_call.1} parent=91 // pred_check
          %p786 = pneg %p381
        $region130: #{tpu_custom_call.1} parent=91 // pred_check_branch
          %788 = sbr.rel (%p786) target = $region132
        $region131: #{tpu_custom_call.1} parent=91 // pred_region
          %789 = dma.done %s783, 16
        $region132: #{tpu_custom_call.1} parent=91 // pred_fallthru
          _
        %p790 = pneg %p48
        %p791 = pneg %p45
        %p792 = pneg %p69
        %p793 = pneg %p66
        %p794 = scmp.lt.s32.totalorder %s32, 1
        %s795 = scalar_select %p794, %s32, 1
        %s796 = smul.addr %s795, 4
        %s797 = smul.addr %s796, 4
        %s798 = scalar_lea.vmem %s2, %s797
        %p799 = pneg %p95
        %p800 = pneg %p92
        %s801 = sand.u32 %s32, 1
        %s802 = scalar_lea.sflag [#allocation4], %s801
        %s803 = sand.u32 %s108, 1
        %s804 = scalar_lea.vmem [#allocation8], %s803
        %p805 = pneg %p121
        %p806 = pneg %p118
        %p807 = scmp.lt.s32.totalorder %s32, 1
        %s808 = scalar_select %p807, %s32, 1
        %s809 = smul.addr %s808, 4
        %s810 = smul.addr %s809, 4
        %s811 = scalar_lea.vmem %s4, %s810
        %p812 = pneg %p147
        %p813 = pneg %p144
        %s814 = sand.u32 %s32, 1
        %s815 = scalar_lea.sflag [#allocation4], %s814
        %s816 = sand.u32 %s160, 1
        %s817 = scalar_lea.vmem [#allocation9], %s816
        %p818 = pneg %p173
        %p819 = pneg %p170
        %s820 = sand.u32 %s32, 1
        %s821 = scalar_lea.sflag [#allocation4], %s820
        %s822 = sand.u32 %s186, 1
        %s823 = scalar_lea.vmem [#allocation10], %s822
        %p824 = pneg %p199
        %p825 = pneg %p196
        %s826 = sand.u32 %s32, 1
        %s827 = scalar_lea.sflag [#allocation4], %s826
        %s828 = sand.u32 %s212, 1
        %s829 = scalar_lea.vmem [#allocation11], %s828
        %p830 = pneg %p225
        %p831 = pneg %p222
        %s832 = sand.u32 %s32, 1
        %s833 = scalar_lea.sflag [#allocation4], %s832
        %s834 = sand.u32 %s238, 1
        %s835 = scalar_lea.vmem [#allocation12], %s834
        %p836 = pneg %p251
        %p837 = pneg %p248
        %s838 = sand.u32 %s32, 1
        %s839 = scalar_lea.sflag [#allocation4], %s838
        %s840 = sand.u32 %s264, 1
        %s841 = scalar_lea.vmem [#allocation13], %s840
        %p842 = pneg %p277
        %p843 = pneg %p274
        %p844 = scmp.lt.s32.totalorder %s32, 1
        %s845 = scalar_select %p844, %s32, 1
        %s846 = smul.addr %s845, 4
        %s847 = smul.addr %s846, 4
        %s848 = scalar_lea.vmem %s10, %s847
        %p849 = pneg %p303
        %p850 = pneg %p300
        %s851 = sand.u32 %s32, 1
        %s852 = scalar_lea.sflag [#allocation4], %s851
        %s853 = sand.u32 %s316, 1
        %s854 = scalar_lea.vmem [#allocation14], %s853
        %p855 = pneg %p329
        %p856 = pneg %p326
        %p857 = scmp.lt.s32.totalorder %s32, 1
        %s858 = scalar_select %p857, %s32, 1
        %s859 = smul.addr %s858, 8
        %s860 = smul.addr %s859, 4
        %s861 = scalar_lea.vmem %s12, %s860
        %p862 = pneg %p355
        %p863 = pneg %p352
        %s864 = sand.u32 %s32, 1
        %s865 = scalar_lea.sflag [#allocation4], %s864
        %s866 = sand.u32 %s368, 1
        %s867 = scalar_lea.vmem [#allocation15], %s866
        %p868 = pneg %p381
        %p869 = pneg %p378
        %p870 = pneg %p402
        %p871 = pneg %p399
        %p872 = pneg %p423
        %p873 = pneg %p420
        %p874 = pneg %p444
        %p875 = pneg %p441
        %p876 = pneg %p465
        %p877 = pneg %p462
        %p878 = pneg %p486
        %p879 = pneg %p483
        %p880 = scmp.lt.s32.totalorder %s32, 1
        %s881 = scalar_select %p880, %s32, 1
        %s882 = smul.addr %s881, 4
        %s883 = smul.addr %s882, 4
        %s884 = scalar_lea.vmem %s2, %s883
        %p885 = scmp.lt.s32.totalorder %s32, 1
        %s886 = scalar_select %p885, %s32, 1
        %s887 = smul.addr %s886, 4
        %s888 = smul.addr %s887, 4
        %s889 = scalar_lea.vmem %s4, %s888
        %p890 = scmp.lt.s32.totalorder %s32, 1
        %s891 = scalar_select %p890, %s32, 1
        %s892 = smul.addr %s891, 4
        %s893 = smul.addr %s892, 4
        %s894 = scalar_lea.vmem %s10, %s893
        %p895 = scmp.lt.s32.totalorder %s32, 1
        %s896 = scalar_select %p895, %s32, 1
        %s897 = smul.addr %s896, 8
        %s898 = smul.addr %s897, 4
        %s899 = scalar_lea.vmem %s12, %s898
        %p901 = scmp.eq.s32.totalorder %s32, 0
        // Predicated region
        $region133: #{tpu_custom_call.1} parent=91 // pred_check
          %p902 = pneg %p901
        $region134: #{tpu_custom_call.1} parent=91 // pred_check_branch
          %904 = sbr.rel (%p902) target = $region136
        $region135: #{tpu_custom_call.1} parent=91 // pred_region
          %v905 = vld [vmem:[#allocation3] sm:$0xff]
          %v906 = vld [vmem:[#allocation3 + $0x8] sm:$0xff]
          %vm907 = vcmask 261120
          %908 = vst.msk [vmem:[#allocation2] sm:$0xff] %vm907, %v905
          %909 = vst.msk [vmem:[#allocation2 + $0x8] sm:$0xff] %vm907, %v906
        $region136: #{tpu_custom_call.1} parent=91 // pred_fallthru
          _
        %v910 = vld [vmem:[#allocation2] sm:$0xff]
        %v911 = vld [vmem:[#allocation2 + $0x8] sm:$0xff]
        %v912 = vld [vmem:[#allocation6] sm:$0x1]
        %v913 = vld [vmem:[#allocation6 + $0x1] sm:$0x1]
        %v914 = vld [vmem:[%s745] sm:$0x1]
        %v915 = vld [vmem:[%s753] sm:$0x1]
        %vm916 = vcmask 261120
        %v917 = vsel %vm916, %v910, 0.0
        %918 = vadd.xlane.f32.xlu0 %v917
        %v919 = vpop.xlane.xlu0 %918
        %v920 = vsel %vm916, %v911, 0.0
        %921 = vadd.xlane.f32.xlu0 %v920
        %v922 = vpop.xlane.xlu0 %921
        %v923 = vrcp.pop 32.0
        %v924 = vmul.f32 %v919, %v923
        %v925 = vmul.f32 %v922, %v923
        %v926 = vsub.f32 %v910, %v924
        %v927 = vsub.f32 %v911, %v925
        %v928 = vmul.f32 %v926, %v926
        %v929 = vmul.f32 %v927, %v927
        %v930 = vsel %vm916, %v928, 0.0
        %931 = vadd.xlane.f32.xlu0 %v930
        %v932 = vpop.xlane.xlu0 %931
        %v933 = vsel %vm916, %v929, 0.0
        %934 = vadd.xlane.f32.xlu0 %v933
        %v935 = vpop.xlane.xlu0 %934
        %v936 = vmul.f32 %v932, 0.032258064
        %v937 = vmul.f32 %v935, 0.032258064
        %v938 = vrsqrt.pop %v936
        %v939 = vmul.f32 %v936, %v938
        %vm940 = vcmp.eq.f32.partialorder %v936, inf
        %v941 = vsel %vm940, %v936, %v939
        %vm942 = vcmp.eq.f32.partialorder %v936, 0.0
        %v943 = vand.u32 %v936, 2147483648
        %v944 = vsel %vm942, %v943, %v941
        %v945 = vrsqrt.pop %v937
        %v946 = vmul.f32 %v937, %v945
        %vm947 = vcmp.eq.f32.partialorder %v937, inf
        %v948 = vsel %vm947, %v937, %v946
        %vm949 = vcmp.eq.f32.partialorder %v937, 0.0
        %v950 = vand.u32 %v937, 2147483648
        %v951 = vsel %vm949, %v950, %v948
        %v952 = vadd.f32 %v944, 1e-06
        %v953 = vadd.f32 %v951, 1e-06
        %v954 = vrcp.pop %v952
        %v955 = vrcp.pop %v953
        %v956 = vmul.f32 %v926, %v954
        %v957 = vmul.f32 %v927, %v955
        %v959 = vlaneseq
        %v960 = vshrl.u32 %v959, 7
        %v961 = vsub.s32 0, %v960
        %v962 = vrot.slane %v914, %v961
        %v964 = vmul.f32 %v956, %v962
        %v965 = vmul.f32 %v957, %v962
        %v967 = vlaneseq
        %v968 = vshrl.u32 %v967, 7
        %v969 = vsub.s32 0, %v968
        %v970 = vrot.slane %v915, %v969
        %v972 = vadd.f32 %v964, %v970
        %v973 = vadd.f32 %v965, %v970
        %v974 = vpack.c.bf16 %v973, %v972
        %v975 = vld [vmem:[%s884] sm:$0xf]
        %v976 = vld [vmem:[%s884 + $0x4] sm:$0xf]
        %v977 = vld [vmem:[%s884 + $0x8] sm:$0xf]
        %v978 = vld [vmem:[%s884 + $0xc] sm:$0xf]
        %v979 = vld [vmem:[%s729] sm:$0x1]
        %v981 = vlaneseq
        %v982 = vshrl.u32 %v981, 7
        %v983 = vsub.s32 0, %v982
        %v984 = vrot.slane %v979, %v983
        %v990 = vunpack.c.l.b16 %v975
        %v991 = vunpack.c.l.b16 %v976
        %v992 = vunpack.c.l.b16 %v977
        %v993 = vunpack.c.l.b16 %v978
        %v994 = vpack.c.b16 %v991, %v990
        %v995 = vpack.c.b16 %v993, %v992
        %v999 = vsel %vm916, %v974, 0
        %1001 = vmatprep.subr.bf16.mxu0 0
        %1002 = vmatpush1.bf16.msra.mxu0 %v994
        %1003 = vmatprep.subr.bf16.mxu0 0
        %1004 = vmatpush1.bf16.msra.mxu0 %v995
        %1005 = vmatprep.subr.bf16.mxu0 0
        %1006 = vmatpush1.bf16.msra.mxu0 0
        %1007 = vmatprep.subr.bf16.mxu0 0
        %1008 = vmatpush1.bf16.msra.mxu0 0
        %1009 = vmatprep.subr.bf16.mxu0 0
        %1010 = vmatpush1.bf16.msra.mxu0 0
        %1011 = vmatprep.subr.bf16.mxu0 0
        %1012 = vmatpush1.bf16.msra.mxu0 0
        %1013 = vmatprep.subr.bf16.mxu0 0
        %1014 = vmatpush1.bf16.msra.mxu0 0
        %1015 = vmatprep.subr.bf16.mxu0 0
        %1016 = vmatpush1.bf16.msra.mxu0 0
        %1017 = vmatprep.subr.bf16.mxu0 0
        %1018 = vmatpush1.bf16.msra.mxu0 0
        %1019 = vmatprep.subr.bf16.mxu0 0
        %1020 = vmatpush1.bf16.msra.mxu0 0
        %1021 = vmatprep.subr.bf16.mxu0 0
        %1022 = vmatpush1.bf16.msra.mxu0 0
        %1023 = vmatprep.subr.bf16.mxu0 0
        %1024 = vmatpush1.bf16.msra.mxu0 0
        %1025 = vmatprep.subr.bf16.mxu0 0
        %1026 = vmatpush1.bf16.msra.mxu0 0
        %1027 = vmatprep.subr.bf16.mxu0 0
        %1028 = vmatpush1.bf16.msra.mxu0 0
        %1029 = vmatprep.subr.bf16.mxu0 0
        %1030 = vmatpush1.bf16.msra.mxu0 0
        %1031 = vmatprep.subr.bf16.mxu0 0
        %1032 = vmatpush1.bf16.msra.mxu0 0
        %1033 = vmatprep.mubr.bf16.mxu0 0
        %1034 = vmatmul.mubr.bf16.gmra.mrb[0].mxu0 %v999
        %v1035 = vpop.f32.mrb[0].mxu0
        %v1036 = vadd.f32 %v984, %v1035
        %v1037 = vpop.f32.mrb[0].mxu0
        %v1038 = vpop.f32.mrb[0].mxu0
        %v1039 = vadd.f32 %v984, %v1038
        %v1040 = vpop.f32.mrb[0].mxu0
        %1041 = vdwg.mxu0
        %v1042 = vpack.c.bf16 %v1036, %v1036
        %v1043 = vpack.c.bf16 %v1039, %v1039
        %v1046 = vlaneseq
        %v1047 = vshrl.u32 %v1046, 7
        %v1048 = vsub.s32 0, %v1047
        %v1049 = vrot.slane %v912, %v1048
        %v1050 = vlaneseq
        %v1051 = vshrl.u32 %v1050, 7
        %v1052 = vsub.s32 0, %v1051
        %v1053 = vrot.slane %v913, %v1052
        %1057 = vrot.lane.b32.xlu0 %v1042, 96
        %v1058 = vpop.permute.xlu0 %1057
        %vm1059 = vcmask 64512
        %v1061 = vsel %vm1059, %v1042, 0
        %v1064 = vsel %vm1059, %v1058, 0
        %1066 = vmatprep.subr.bf16.mxu0 0
        %1067 = vmatpush1.bf16.xpose.msra.mxu0 %v1064
        %1068 = vmatprep.subr.bf16.mxu0 0
        %1069 = vmatpush1.bf16.xpose.msra.mxu0 0
        %1070 = vmatprep.subr.bf16.mxu0 0
        %1071 = vmatpush1.bf16.xpose.msra.mxu0 0
        %1072 = vmatprep.subr.bf16.mxu0 0
        %1073 = vmatpush1.bf16.xpose.msra.mxu0 0
        %1074 = vmatprep.subr.bf16.mxu0 0
        %1075 = vmatpush1.bf16.xpose.msra.mxu0 0
        %1076 = vmatprep.subr.bf16.mxu0 0
        %1077 = vmatpush1.bf16.xpose.msra.mxu0 0
        %1078 = vmatprep.subr.bf16.mxu0 0
        %1079 = vmatpush1.bf16.xpose.msra.mxu0 0
        %1080 = vmatprep.subr.bf16.mxu0 0
        %1081 = vmatpush1.bf16.xpose.msra.mxu0 0
        %1082 = vmatprep.subr.bf16.mxu0 0
        %1083 = vmatpush1.bf16.xpose.msra.mxu0 0
        %1084 = vmatprep.subr.bf16.mxu0 0
        %1085 = vmatpush1.bf16.xpose.msra.mxu0 0
        %1086 = vmatprep.subr.bf16.mxu0 0
        %1087 = vmatpush1.bf16.xpose.msra.mxu0 0
        %1088 = vmatprep.subr.bf16.mxu0 0
        %1089 = vmatpush1.bf16.xpose.msra.mxu0 0
        %1090 = vmatprep.subr.bf16.mxu0 0
        %1091 = vmatpush1.bf16.xpose.msra.mxu0 0
        %1092 = vmatprep.subr.bf16.mxu0 0
        %1093 = vmatpush1.bf16.xpose.msra.mxu0 0
        %1094 = vmatprep.subr.bf16.mxu0 0
        %1095 = vmatpush1.bf16.xpose.msra.mxu0 0
        %1096 = vmatprep.subr.bf16.mxu0 0
        %1097 = vmatpush1.bf16.xpose.msra.mxu0 0
        %1098 = vmatprep.mubr.bf16.mxu0 0
        %1099 = vmatmul.mubr.bf16.gmra.mrb[0].mxu0 %v1061
        %v1100 = vpop.f32.mrb[0].mxu0
        %v1101 = vadd.f32 %v1049, %v1100
        %v1102 = vpop.f32.mrb[0].mxu0
        %v1103 = vpop.f32.mrb[0].mxu0
        %v1104 = vpop.f32.mrb[0].mxu0
        %1105 = vdwg.mxu0
        %1107 = vrot.lane.b32.xlu0 %v1043, 96
        %v1108 = vpop.permute.xlu0 %1107
        %v1110 = vsel %vm1059, %v1043, 0
        %v1113 = vsel %vm1059, %v1108, 0
        %1115 = vmatprep.subr.bf16.mxu0 0
        %1116 = vmatpush1.bf16.xpose.msra.mxu0 %v1113
        %1117 = vmatprep.subr.bf16.mxu0 0
        %1118 = vmatpush1.bf16.xpose.msra.mxu0 0
        %1119 = vmatprep.subr.bf16.mxu0 0
        %1120 = vmatpush1.bf16.xpose.msra.mxu0 0
        %1121 = vmatprep.subr.bf16.mxu0 0
        %1122 = vmatpush1.bf16.xpose.msra.mxu0 0
        %1123 = vmatprep.subr.bf16.mxu0 0
        %1124 = vmatpush1.bf16.xpose.msra.mxu0 0
        %1125 = vmatprep.subr.bf16.mxu0 0
        %1126 = vmatpush1.bf16.xpose.msra.mxu0 0
        %1127 = vmatprep.subr.bf16.mxu0 0
        %1128 = vmatpush1.bf16.xpose.msra.mxu0 0
        %1129 = vmatprep.subr.bf16.mxu0 0
        %1130 = vmatpush1.bf16.xpose.msra.mxu0 0
        %1131 = vmatprep.subr.bf16.mxu0 0
        %1132 = vmatpush1.bf16.xpose.msra.mxu0 0
        %1133 = vmatprep.subr.bf16.mxu0 0
        %1134 = vmatpush1.bf16.xpose.msra.mxu0 0
        %1135 = vmatprep.subr.bf16.mxu0 0
        %1136 = vmatpush1.bf16.xpose.msra.mxu0 0
        %1137 = vmatprep.subr.bf16.mxu0 0
        %1138 = vmatpush1.bf16.xpose.msra.mxu0 0
        %1139 = vmatprep.subr.bf16.mxu0 0
        %1140 = vmatpush1.bf16.xpose.msra.mxu0 0
        %1141 = vmatprep.subr.bf16.mxu0 0
        %1142 = vmatpush1.bf16.xpose.msra.mxu0 0
        %1143 = vmatprep.subr.bf16.mxu0 0
        %1144 = vmatpush1.bf16.xpose.msra.mxu0 0
        %1145 = vmatprep.subr.bf16.mxu0 0
        %1146 = vmatpush1.bf16.xpose.msra.mxu0 0
        %1147 = vmatprep.mubr.bf16.mxu0 0
        %1148 = vmatmul.mubr.bf16.gmra.mrb[0].mxu0 %v1110
        %v1149 = vpop.f32.mrb[0].mxu0
        %v1150 = vadd.f32 %v1053, %v1149
        %v1151 = vpop.f32.mrb[0].mxu0
        %v1152 = vpop.f32.mrb[0].mxu0
        %v1153 = vpop.f32.mrb[0].mxu0
        %1154 = vdwg.mxu0
        %v1155 = vsel %vm1059, %v1101, -inf
        %1156 = vmax.xlane.f32.xlu0 %v1155
        %v1157 = vpop.xlane.xlu0 %1156
        %v1158 = vsel %vm1059, %v1150, -inf
        %1159 = vmax.xlane.f32.xlu0 %v1158
        %v1160 = vpop.xlane.xlu0 %1159
        %v1161 = vsub.f32 %v1101, %v1157
        %v1162 = vsub.f32 %v1150, %v1160
        %v1163 = vmul.f32 %v1161, 1.442695
        %v1164 = vpow.pop %v1163
        %v1165 = vmul.f32 %v1162, 1.442695
        %v1166 = vpow.pop %v1165
        %v1167 = vsel %vm1059, %v1164, 0.0
        %1168 = vadd.xlane.f32.xlu0 %v1167
        %v1169 = vpop.xlane.xlu0 %1168
        %v1170 = vsel %vm1059, %v1166, 0.0
        %1171 = vadd.xlane.f32.xlu0 %v1170
        %v1172 = vpop.xlane.xlu0 %1171
        %v1173 = vrcp.pop %v1169
        %v1174 = vrcp.pop %v1172
        %v1175 = vmul.f32 %v1164, %v1173
        %v1176 = vmul.f32 %v1166, %v1174
        %v1177 = vpack.c.bf16 %v1175, %v1175
        %v1178 = vpack.c.bf16 %v1176, %v1176
        %1179 = vrot.lane.b32.xlu0 %v1042, 64
        %v1180 = vpop.permute.xlu0 %1179
        %v1182 = vsel %vm1059, %v1177, 0
        %vm1184 = vcmask 1043456
        %v1186 = vsel %vm1184, %v1180, 0
        %1188 = vmatprep.subr.bf16.mxu0 0
        %1189 = vmatpush1.bf16.msra.mxu0 %v1186
        %1190 = vmatprep.subr.bf16.mxu0 0
        %1191 = vmatpush1.bf16.msra.mxu0 0
        %1192 = vmatprep.subr.bf16.mxu0 0
        %1193 = vmatpush1.bf16.msra.mxu0 0
        %1194 = vmatprep.subr.bf16.mxu0 0
        %1195 = vmatpush1.bf16.msra.mxu0 0
        %1196 = vmatprep.subr.bf16.mxu0 0
        %1197 = vmatpush1.bf16.msra.mxu0 0
        %1198 = vmatprep.subr.bf16.mxu0 0
        %1199 = vmatpush1.bf16.msra.mxu0 0
        %1200 = vmatprep.subr.bf16.mxu0 0
        %1201 = vmatpush1.bf16.msra.mxu0 0
        %1202 = vmatprep.subr.bf16.mxu0 0
        %1203 = vmatpush1.bf16.msra.mxu0 0
        %1204 = vmatprep.subr.bf16.mxu0 0
        %1205 = vmatpush1.bf16.msra.mxu0 0
        %1206 = vmatprep.subr.bf16.mxu0 0
        %1207 = vmatpush1.bf16.msra.mxu0 0
        %1208 = vmatprep.subr.bf16.mxu0 0
        %1209 = vmatpush1.bf16.msra.mxu0 0
        %1210 = vmatprep.subr.bf16.mxu0 0
        %1211 = vmatpush1.bf16.msra.mxu0 0
        %1212 = vmatprep.subr.bf16.mxu0 0
        %1213 = vmatpush1.bf16.msra.mxu0 0
        %1214 = vmatprep.subr.bf16.mxu0 0
        %1215 = vmatpush1.bf16.msra.mxu0 0
        %1216 = vmatprep.subr.bf16.mxu0 0
        %1217 = vmatpush1.bf16.msra.mxu0 0
        %1218 = vmatprep.subr.bf16.mxu0 0
        %1219 = vmatpush1.bf16.msra.mxu0 0
        %1220 = vmatprep.mubr.bf16.mxu0 0
        %1221 = vmatmul.mubr.bf16.gmra.mrb[0].mxu0 %v1182
        %v1222 = vpop.f32.mrb[0].mxu0
        %v1223 = vadd.f32 0.0, %v1222
        %v1224 = vpop.f32.mrb[0].mxu0
        %v1225 = vpop.f32.mrb[0].mxu0
        %v1226 = vpop.f32.mrb[0].mxu0
        %1227 = vdwg.mxu0
        %1228 = vrot.lane.b32.xlu0 %v1043, 64
        %v1229 = vpop.permute.xlu0 %1228
        %v1231 = vsel %vm1059, %v1178, 0
        %v1234 = vsel %vm1184, %v1229, 0
        %1236 = vmatprep.subr.bf16.mxu0 0
        %1237 = vmatpush1.bf16.msra.mxu0 %v1234
        %1238 = vmatprep.subr.bf16.mxu0 0
        %1239 = vmatpush1.bf16.msra.mxu0 0
        %1240 = vmatprep.subr.bf16.mxu0 0
        %1241 = vmatpush1.bf16.msra.mxu0 0
        %1242 = vmatprep.subr.bf16.mxu0 0
        %1243 = vmatpush1.bf16.msra.mxu0 0
        %1244 = vmatprep.subr.bf16.mxu0 0
        %1245 = vmatpush1.bf16.msra.mxu0 0
        %1246 = vmatprep.subr.bf16.mxu0 0
        %1247 = vmatpush1.bf16.msra.mxu0 0
        %1248 = vmatprep.subr.bf16.mxu0 0
        %1249 = vmatpush1.bf16.msra.mxu0 0
        %1250 = vmatprep.subr.bf16.mxu0 0
        %1251 = vmatpush1.bf16.msra.mxu0 0
        %1252 = vmatprep.subr.bf16.mxu0 0
        %1253 = vmatpush1.bf16.msra.mxu0 0
        %1254 = vmatprep.subr.bf16.mxu0 0
        %1255 = vmatpush1.bf16.msra.mxu0 0
        %1256 = vmatprep.subr.bf16.mxu0 0
        %1257 = vmatpush1.bf16.msra.mxu0 0
        %1258 = vmatprep.subr.bf16.mxu0 0
        %1259 = vmatpush1.bf16.msra.mxu0 0
        %1260 = vmatprep.subr.bf16.mxu0 0
        %1261 = vmatpush1.bf16.msra.mxu0 0
        %1262 = vmatprep.subr.bf16.mxu0 0
        %1263 = vmatpush1.bf16.msra.mxu0 0
        %1264 = vmatprep.subr.bf16.mxu0 0
        %1265 = vmatpush1.bf16.msra.mxu0 0
        %1266 = vmatprep.subr.bf16.mxu0 0
        %1267 = vmatpush1.bf16.msra.mxu0 0
        %1268 = vmatprep.mubr.bf16.mxu0 0
        %1269 = vmatmul.mubr.bf16.gmra.mrb[0].mxu0 %v1231
        %v1270 = vpop.f32.mrb[0].mxu0
        %v1271 = vadd.f32 0.0, %v1270
        %v1272 = vpop.f32.mrb[0].mxu0
        %v1273 = vpop.f32.mrb[0].mxu0
        %v1274 = vpop.f32.mrb[0].mxu0
        %1275 = vdwg.mxu0
        %1276 = vrot.lane.b32.xlu0 %v1042, 120
        %v1277 = vpop.permute.xlu0 %1276
        %1278 = vrot.lane.b32.xlu0 %v1042, 88
        %v1279 = vpop.permute.xlu0 %1278
        %v1281 = vsel %vm1059, %v1277, 0
        %v1284 = vsel %vm1059, %v1279, 0
        %1286 = vmatprep.subr.bf16.mxu0 0
        %1287 = vmatpush1.bf16.xpose.msra.mxu0 %v1284
        %1288 = vmatprep.subr.bf16.mxu0 0
        %1289 = vmatpush1.bf16.xpose.msra.mxu0 0
        %1290 = vmatprep.subr.bf16.mxu0 0
        %1291 = vmatpush1.bf16.xpose.msra.mxu0 0
        %1292 = vmatprep.subr.bf16.mxu0 0
        %1293 = vmatpush1.bf16.xpose.msra.mxu0 0
        %1294 = vmatprep.subr.bf16.mxu0 0
        %1295 = vmatpush1.bf16.xpose.msra.mxu0 0
        %1296 = vmatprep.subr.bf16.mxu0 0
        %1297 = vmatpush1.bf16.xpose.msra.mxu0 0
        %1298 = vmatprep.subr.bf16.mxu0 0
        %1299 = vmatpush1.bf16.xpose.msra.mxu0 0
        %1300 = vmatprep.subr.bf16.mxu0 0
        %1301 = vmatpush1.bf16.xpose.msra.mxu0 0
        %1302 = vmatprep.subr.bf16.mxu0 0
        %1303 = vmatpush1.bf16.xpose.msra.mxu0 0
        %1304 = vmatprep.subr.bf16.mxu0 0
        %1305 = vmatpush1.bf16.xpose.msra.mxu0 0
        %1306 = vmatprep.subr.bf16.mxu0 0
        %1307 = vmatpush1.bf16.xpose.msra.mxu0 0
        %1308 = vmatprep.subr.bf16.mxu0 0
        %1309 = vmatpush1.bf16.xpose.msra.mxu0 0
        %1310 = vmatprep.subr.bf16.mxu0 0
        %1311 = vmatpush1.bf16.xpose.msra.mxu0 0
        %1312 = vmatprep.subr.bf16.mxu0 0
        %1313 = vmatpush1.bf16.xpose.msra.mxu0 0
        %1314 = vmatprep.subr.bf16.mxu0 0
        %1315 = vmatpush1.bf16.xpose.msra.mxu0 0
        %1316 = vmatprep.subr.bf16.mxu0 0
        %1317 = vmatpush1.bf16.xpose.msra.mxu0 0
        %1318 = vmatprep.mubr.bf16.mxu0 0
        %1319 = vmatmul.mubr.bf16.gmra.mrb[0].mxu0 %v1281
        %v1320 = vpop.f32.mrb[0].mxu0
        %v1321 = vadd.f32 %v1049, %v1320
        %v1322 = vpop.f32.mrb[0].mxu0
        %v1323 = vpop.f32.mrb[0].mxu0
        %v1324 = vpop.f32.mrb[0].mxu0
        %1325 = vdwg.mxu0
        %1326 = vrot.lane.b32.xlu0 %v1043, 120
        %v1327 = vpop.permute.xlu0 %1326
        %1328 = vrot.lane.b32.xlu0 %v1043, 88
        %v1329 = vpop.permute.xlu0 %1328
        %v1331 = vsel %vm1059, %v1327, 0
        %v1334 = vsel %vm1059, %v1329, 0
        %1336 = vmatprep.subr.bf16.mxu0 0
        %1337 = vmatpush1.bf16.xpose.msra.mxu0 %v1334
        %1338 = vmatprep.subr.bf16.mxu0 0
        %1339 = vmatpush1.bf16.xpose.msra.mxu0 0
        %1340 = vmatprep.subr.bf16.mxu0 0
        %1341 = vmatpush1.bf16.xpose.msra.mxu0 0
        %1342 = vmatprep.subr.bf16.mxu0 0
        %1343 = vmatpush1.bf16.xpose.msra.mxu0 0
        %1344 = vmatprep.subr.bf16.mxu0 0
        %1345 = vmatpush1.bf16.xpose.msra.mxu0 0
        %1346 = vmatprep.subr.bf16.mxu0 0
        %1347 = vmatpush1.bf16.xpose.msra.mxu0 0
        %1348 = vmatprep.subr.bf16.mxu0 0
        %1349 = vmatpush1.bf16.xpose.msra.mxu0 0
        %1350 = vmatprep.subr.bf16.mxu0 0
        %1351 = vmatpush1.bf16.xpose.msra.mxu0 0
        %1352 = vmatprep.subr.bf16.mxu0 0
        %1353 = vmatpush1.bf16.xpose.msra.mxu0 0
        %1354 = vmatprep.subr.bf16.mxu0 0
        %1355 = vmatpush1.bf16.xpose.msra.mxu0 0
        %1356 = vmatprep.subr.bf16.mxu0 0
        %1357 = vmatpush1.bf16.xpose.msra.mxu0 0
        %1358 = vmatprep.subr.bf16.mxu0 0
        %1359 = vmatpush1.bf16.xpose.msra.mxu0 0
        %1360 = vmatprep.subr.bf16.mxu0 0
        %1361 = vmatpush1.bf16.xpose.msra.mxu0 0
        %1362 = vmatprep.subr.bf16.mxu0 0
        %1363 = vmatpush1.bf16.xpose.msra.mxu0 0
        %1364 = vmatprep.subr.bf16.mxu0 0
        %1365 = vmatpush1.bf16.xpose.msra.mxu0 0
        %1366 = vmatprep.subr.bf16.mxu0 0
        %1367 = vmatpush1.bf16.xpose.msra.mxu0 0
        %1368 = vmatprep.mubr.bf16.mxu0 0
        %1369 = vmatmul.mubr.bf16.gmra.mrb[0].mxu0 %v1331
        %v1370 = vpop.f32.mrb[0].mxu0
        %v1371 = vadd.f32 %v1053, %v1370
        %v1372 = vpop.f32.mrb[0].mxu0
        %v1373 = vpop.f32.mrb[0].mxu0
        %v1374 = vpop.f32.mrb[0].mxu0
        %1375 = vdwg.mxu0
        %v1376 = vsel %vm1059, %v1321, -inf
        %1377 = vmax.xlane.f32.xlu0 %v1376
        %v1378 = vpop.xlane.xlu0 %1377
        %v1379 = vsel %vm1059, %v1371, -inf
        %1380 = vmax.xlane.f32.xlu0 %v1379
        %v1381 = vpop.xlane.xlu0 %1380
        %v1382 = vsub.f32 %v1321, %v1378
        %v1383 = vsub.f32 %v1371, %v1381
        %v1384 = vmul.f32 %v1382, 1.442695
        %v1385 = vpow.pop %v1384
        %v1386 = vmul.f32 %v1383, 1.442695
        %v1387 = vpow.pop %v1386
        %v1388 = vsel %vm1059, %v1385, 0.0
        %1389 = vadd.xlane.f32.xlu0 %v1388
        %v1390 = vpop.xlane.xlu0 %1389
        %v1391 = vsel %vm1059, %v1387, 0.0
        %1392 = vadd.xlane.f32.xlu0 %v1391
        %v1393 = vpop.xlane.xlu0 %1392
        %v1394 = vrcp.pop %v1390
        %v1395 = vrcp.pop %v1393
        %v1396 = vmul.f32 %v1385, %v1394
        %v1397 = vmul.f32 %v1387, %v1395
        %v1398 = vpack.c.bf16 %v1396, %v1396
        %v1399 = vpack.c.bf16 %v1397, %v1397
        %1400 = vrot.lane.b32.xlu0 %v1042, 56
        %v1401 = vpop.permute.xlu0 %1400
        %v1403 = vsel %vm1059, %v1398, 0
        %v1406 = vsel %vm1184, %v1401, 0
        %1408 = vmatprep.subr.bf16.mxu0 0
        %1409 = vmatpush1.bf16.msra.mxu0 %v1406
        %1410 = vmatprep.subr.bf16.mxu0 0
        %1411 = vmatpush1.bf16.msra.mxu0 0
        %1412 = vmatprep.subr.bf16.mxu0 0
        %1413 = vmatpush1.bf16.msra.mxu0 0
        %1414 = vmatprep.subr.bf16.mxu0 0
        %1415 = vmatpush1.bf16.msra.mxu0 0
        %1416 = vmatprep.subr.bf16.mxu0 0
        %1417 = vmatpush1.bf16.msra.mxu0 0
        %1418 = vmatprep.subr.bf16.mxu0 0
        %1419 = vmatpush1.bf16.msra.mxu0 0
        %1420 = vmatprep.subr.bf16.mxu0 0
        %1421 = vmatpush1.bf16.msra.mxu0 0
        %1422 = vmatprep.subr.bf16.mxu0 0
        %1423 = vmatpush1.bf16.msra.mxu0 0
        %1424 = vmatprep.subr.bf16.mxu0 0
        %1425 = vmatpush1.bf16.msra.mxu0 0
        %1426 = vmatprep.subr.bf16.mxu0 0
        %1427 = vmatpush1.bf16.msra.mxu0 0
        %1428 = vmatprep.subr.bf16.mxu0 0
        %1429 = vmatpush1.bf16.msra.mxu0 0
        %1430 = vmatprep.subr.bf16.mxu0 0
        %1431 = vmatpush1.bf16.msra.mxu0 0
        %1432 = vmatprep.subr.bf16.mxu0 0
        %1433 = vmatpush1.bf16.msra.mxu0 0
        %1434 = vmatprep.subr.bf16.mxu0 0
        %1435 = vmatpush1.bf16.msra.mxu0 0
        %1436 = vmatprep.subr.bf16.mxu0 0
        %1437 = vmatpush1.bf16.msra.mxu0 0
        %1438 = vmatprep.subr.bf16.mxu0 0
        %1439 = vmatpush1.bf16.msra.mxu0 0
        %1440 = vmatprep.mubr.bf16.mxu0 0
        %1441 = vmatmul.mubr.bf16.gmra.mrb[0].mxu0 %v1403
        %v1442 = vpop.f32.mrb[0].mxu0
        %v1443 = vadd.f32 0.0, %v1442
        %v1444 = vpop.f32.mrb[0].mxu0
        %v1445 = vpop.f32.mrb[0].mxu0
        %v1446 = vpop.f32.mrb[0].mxu0
        %1447 = vdwg.mxu0
        %1448 = vrot.lane.b32.xlu0 %v1043, 56
        %v1449 = vpop.permute.xlu0 %1448
        %v1451 = vsel %vm1059, %v1399, 0
        %v1454 = vsel %vm1184, %v1449, 0
        %1456 = vmatprep.subr.bf16.mxu0 0
        %1457 = vmatpush1.bf16.msra.mxu0 %v1454
        %1458 = vmatprep.subr.bf16.mxu0 0
        %1459 = vmatpush1.bf16.msra.mxu0 0
        %1460 = vmatprep.subr.bf16.mxu0 0
        %1461 = vmatpush1.bf16.msra.mxu0 0
        %1462 = vmatprep.subr.bf16.mxu0 0
        %1463 = vmatpush1.bf16.msra.mxu0 0
        %1464 = vmatprep.subr.bf16.mxu0 0
        %1465 = vmatpush1.bf16.msra.mxu0 0
        %1466 = vmatprep.subr.bf16.mxu0 0
        %1467 = vmatpush1.bf16.msra.mxu0 0
        %1468 = vmatprep.subr.bf16.mxu0 0
        %1469 = vmatpush1.bf16.msra.mxu0 0
        %1470 = vmatprep.subr.bf16.mxu0 0
        %1471 = vmatpush1.bf16.msra.mxu0 0
        %1472 = vmatprep.subr.bf16.mxu0 0
        %1473 = vmatpush1.bf16.msra.mxu0 0
        %1474 = vmatprep.subr.bf16.mxu0 0
        %1475 = vmatpush1.bf16.msra.mxu0 0
        %1476 = vmatprep.subr.bf16.mxu0 0
        %1477 = vmatpush1.bf16.msra.mxu0 0
        %1478 = vmatprep.subr.bf16.mxu0 0
        %1479 = vmatpush1.bf16.msra.mxu0 0
        %1480 = vmatprep.subr.bf16.mxu0 0
        %1481 = vmatpush1.bf16.msra.mxu0 0
        %1482 = vmatprep.subr.bf16.mxu0 0
        %1483 = vmatpush1.bf16.msra.mxu0 0
        %1484 = vmatprep.subr.bf16.mxu0 0
        %1485 = vmatpush1.bf16.msra.mxu0 0
        %1486 = vmatprep.subr.bf16.mxu0 0
        %1487 = vmatpush1.bf16.msra.mxu0 0
        %1488 = vmatprep.mubr.bf16.mxu0 0
        %1489 = vmatmul.mubr.bf16.gmra.mrb[0].mxu0 %v1451
        %v1490 = vpop.f32.mrb[0].mxu0
        %v1491 = vadd.f32 0.0, %v1490
        %v1492 = vpop.f32.mrb[0].mxu0
        %v1493 = vpop.f32.mrb[0].mxu0
        %v1494 = vpop.f32.mrb[0].mxu0
        %1495 = vdwg.mxu0
        %1496 = vrot.lane.b32.xlu0 %v1042, 112
        %v1497 = vpop.permute.xlu0 %1496
        %1498 = vrot.lane.b32.xlu0 %v1042, 80
        %v1499 = vpop.permute.xlu0 %1498
        %v1501 = vsel %vm1059, %v1497, 0
        %v1504 = vsel %vm1059, %v1499, 0
        %1506 = vmatprep.subr.bf16.mxu0 0
        %1507 = vmatpush1.bf16.xpose.msra.mxu0 %v1504
        %1508 = vmatprep.subr.bf16.mxu0 0
        %1509 = vmatpush1.bf16.xpose.msra.mxu0 0
        %1510 = vmatprep.subr.bf16.mxu0 0
        %1511 = vmatpush1.bf16.xpose.msra.mxu0 0
        %1512 = vmatprep.subr.bf16.mxu0 0
        %1513 = vmatpush1.bf16.xpose.msra.mxu0 0
        %1514 = vmatprep.subr.bf16.mxu0 0
        %1515 = vmatpush1.bf16.xpose.msra.mxu0 0
        %1516 = vmatprep.subr.bf16.mxu0 0
        %1517 = vmatpush1.bf16.xpose.msra.mxu0 0
        %1518 = vmatprep.subr.bf16.mxu0 0
        %1519 = vmatpush1.bf16.xpose.msra.mxu0 0
        %1520 = vmatprep.subr.bf16.mxu0 0
        %1521 = vmatpush1.bf16.xpose.msra.mxu0 0
        %1522 = vmatprep.subr.bf16.mxu0 0
        %1523 = vmatpush1.bf16.xpose.msra.mxu0 0
        %1524 = vmatprep.subr.bf16.mxu0 0
        %1525 = vmatpush1.bf16.xpose.msra.mxu0 0
        %1526 = vmatprep.subr.bf16.mxu0 0
        %1527 = vmatpush1.bf16.xpose.msra.mxu0 0
        %1528 = vmatprep.subr.bf16.mxu0 0
        %1529 = vmatpush1.bf16.xpose.msra.mxu0 0
        %1530 = vmatprep.subr.bf16.mxu0 0
        %1531 = vmatpush1.bf16.xpose.msra.mxu0 0
        %1532 = vmatprep.subr.bf16.mxu0 0
        %1533 = vmatpush1.bf16.xpose.msra.mxu0 0
        %1534 = vmatprep.subr.bf16.mxu0 0
        %1535 = vmatpush1.bf16.xpose.msra.mxu0 0
        %1536 = vmatprep.subr.bf16.mxu0 0
        %1537 = vmatpush1.bf16.xpose.msra.mxu0 0
        %1538 = vmatprep.mubr.bf16.mxu0 0
        %1539 = vmatmul.mubr.bf16.gmra.mrb[0].mxu0 %v1501
        %v1540 = vpop.f32.mrb[0].mxu0
        %v1541 = vadd.f32 %v1049, %v1540
        %v1542 = vpop.f32.mrb[0].mxu0
        %v1543 = vpop.f32.mrb[0].mxu0
        %v1544 = vpop.f32.mrb[0].mxu0
        %1545 = vdwg.mxu0
        %1546 = vrot.lane.b32.xlu0 %v1043, 112
        %v1547 = vpop.permute.xlu0 %1546
        %1548 = vrot.lane.b32.xlu0 %v1043, 80
        %v1549 = vpop.permute.xlu0 %1548
        %v1551 = vsel %vm1059, %v1547, 0
        %v1554 = vsel %vm1059, %v1549, 0
        %1556 = vmatprep.subr.bf16.mxu0 0
        %1557 = vmatpush1.bf16.xpose.msra.mxu0 %v1554
        %1558 = vmatprep.subr.bf16.mxu0 0
        %1559 = vmatpush1.bf16.xpose.msra.mxu0 0
        %1560 = vmatprep.subr.bf16.mxu0 0
        %1561 = vmatpush1.bf16.xpose.msra.mxu0 0
        %1562 = vmatprep.subr.bf16.mxu0 0
        %1563 = vmatpush1.bf16.xpose.msra.mxu0 0
        %1564 = vmatprep.subr.bf16.mxu0 0
        %1565 = vmatpush1.bf16.xpose.msra.mxu0 0
        %1566 = vmatprep.subr.bf16.mxu0 0
        %1567 = vmatpush1.bf16.xpose.msra.mxu0 0
        %1568 = vmatprep.subr.bf16.mxu0 0
        %1569 = vmatpush1.bf16.xpose.msra.mxu0 0
        %1570 = vmatprep.subr.bf16.mxu0 0
        %1571 = vmatpush1.bf16.xpose.msra.mxu0 0
        %1572 = vmatprep.subr.bf16.mxu0 0
        %1573 = vmatpush1.bf16.xpose.msra.mxu0 0
        %1574 = vmatprep.subr.bf16.mxu0 0
        %1575 = vmatpush1.bf16.xpose.msra.mxu0 0
        %1576 = vmatprep.subr.bf16.mxu0 0
        %1577 = vmatpush1.bf16.xpose.msra.mxu0 0
        %1578 = vmatprep.subr.bf16.mxu0 0
        %1579 = vmatpush1.bf16.xpose.msra.mxu0 0
        %1580 = vmatprep.subr.bf16.mxu0 0
        %1581 = vmatpush1.bf16.xpose.msra.mxu0 0
        %1582 = vmatprep.subr.bf16.mxu0 0
        %1583 = vmatpush1.bf16.xpose.msra.mxu0 0
        %1584 = vmatprep.subr.bf16.mxu0 0
        %1585 = vmatpush1.bf16.xpose.msra.mxu0 0
        %1586 = vmatprep.subr.bf16.mxu0 0
        %1587 = vmatpush1.bf16.xpose.msra.mxu0 0
        %1588 = vmatprep.mubr.bf16.mxu0 0
        %1589 = vmatmul.mubr.bf16.gmra.mrb[0].mxu0 %v1551
        %v1590 = vpop.f32.mrb[0].mxu0
        %v1591 = vadd.f32 %v1053, %v1590
        %v1592 = vpop.f32.mrb[0].mxu0
        %v1593 = vpop.f32.mrb[0].mxu0
        %v1594 = vpop.f32.mrb[0].mxu0
        %1595 = vdwg.mxu0
        %v1596 = vsel %vm1059, %v1541, -inf
        %1597 = vmax.xlane.f32.xlu0 %v1596
        %v1598 = vpop.xlane.xlu0 %1597
        %v1599 = vsel %vm1059, %v1591, -inf
        %1600 = vmax.xlane.f32.xlu0 %v1599
        %v1601 = vpop.xlane.xlu0 %1600
        %v1602 = vsub.f32 %v1541, %v1598
        %v1603 = vsub.f32 %v1591, %v1601
        %v1604 = vmul.f32 %v1602, 1.442695
        %v1605 = vpow.pop %v1604
        %v1606 = vmul.f32 %v1603, 1.442695
        %v1607 = vpow.pop %v1606
        %v1608 = vsel %vm1059, %v1605, 0.0
        %1609 = vadd.xlane.f32.xlu0 %v1608
        %v1610 = vpop.xlane.xlu0 %1609
        %v1611 = vsel %vm1059, %v1607, 0.0
        %1612 = vadd.xlane.f32.xlu0 %v1611
        %v1613 = vpop.xlane.xlu0 %1612
        %v1614 = vrcp.pop %v1610
        %v1615 = vrcp.pop %v1613
        %v1616 = vmul.f32 %v1605, %v1614
        %v1617 = vmul.f32 %v1607, %v1615
        %v1618 = vpack.c.bf16 %v1616, %v1616
        %v1619 = vpack.c.bf16 %v1617, %v1617
        %1620 = vrot.lane.b32.xlu0 %v1042, 48
        %v1621 = vpop.permute.xlu0 %1620
        %v1623 = vsel %vm1059, %v1618, 0
        %v1626 = vsel %vm1184, %v1621, 0
        %1628 = vmatprep.subr.bf16.mxu0 0
        %1629 = vmatpush1.bf16.msra.mxu0 %v1626
        %1630 = vmatprep.subr.bf16.mxu0 0
        %1631 = vmatpush1.bf16.msra.mxu0 0
        %1632 = vmatprep.subr.bf16.mxu0 0
        %1633 = vmatpush1.bf16.msra.mxu0 0
        %1634 = vmatprep.subr.bf16.mxu0 0
        %1635 = vmatpush1.bf16.msra.mxu0 0
        %1636 = vmatprep.subr.bf16.mxu0 0
        %1637 = vmatpush1.bf16.msra.mxu0 0
        %1638 = vmatprep.subr.bf16.mxu0 0
        %1639 = vmatpush1.bf16.msra.mxu0 0
        %1640 = vmatprep.subr.bf16.mxu0 0
        %1641 = vmatpush1.bf16.msra.mxu0 0
        %1642 = vmatprep.subr.bf16.mxu0 0
        %1643 = vmatpush1.bf16.msra.mxu0 0
        %1644 = vmatprep.subr.bf16.mxu0 0
        %1645 = vmatpush1.bf16.msra.mxu0 0
        %1646 = vmatprep.subr.bf16.mxu0 0
        %1647 = vmatpush1.bf16.msra.mxu0 0
        %1648 = vmatprep.subr.bf16.mxu0 0
        %1649 = vmatpush1.bf16.msra.mxu0 0
        %1650 = vmatprep.subr.bf16.mxu0 0
        %1651 = vmatpush1.bf16.msra.mxu0 0
        %1652 = vmatprep.subr.bf16.mxu0 0
        %1653 = vmatpush1.bf16.msra.mxu0 0
        %1654 = vmatprep.subr.bf16.mxu0 0
        %1655 = vmatpush1.bf16.msra.mxu0 0
        %1656 = vmatprep.subr.bf16.mxu0 0
        %1657 = vmatpush1.bf16.msra.mxu0 0
        %1658 = vmatprep.subr.bf16.mxu0 0
        %1659 = vmatpush1.bf16.msra.mxu0 0
        %1660 = vmatprep.mubr.bf16.mxu0 0
        %1661 = vmatmul.mubr.bf16.gmra.mrb[0].mxu0 %v1623
        %v1662 = vpop.f32.mrb[0].mxu0
        %v1663 = vadd.f32 0.0, %v1662
        %v1664 = vpop.f32.mrb[0].mxu0
        %v1665 = vpop.f32.mrb[0].mxu0
        %v1666 = vpop.f32.mrb[0].mxu0
        %1667 = vdwg.mxu0
        %1668 = vrot.lane.b32.xlu0 %v1043, 48
        %v1669 = vpop.permute.xlu0 %1668
        %v1671 = vsel %vm1059, %v1619, 0
        %v1674 = vsel %vm1184, %v1669, 0
        %1676 = vmatprep.subr.bf16.mxu0 0
        %1677 = vmatpush1.bf16.msra.mxu0 %v1674
        %1678 = vmatprep.subr.bf16.mxu0 0
        %1679 = vmatpush1.bf16.msra.mxu0 0
        %1680 = vmatprep.subr.bf16.mxu0 0
        %1681 = vmatpush1.bf16.msra.mxu0 0
        %1682 = vmatprep.subr.bf16.mxu0 0
        %1683 = vmatpush1.bf16.msra.mxu0 0
        %1684 = vmatprep.subr.bf16.mxu0 0
        %1685 = vmatpush1.bf16.msra.mxu0 0
        %1686 = vmatprep.subr.bf16.mxu0 0
        %1687 = vmatpush1.bf16.msra.mxu0 0
        %1688 = vmatprep.subr.bf16.mxu0 0
        %1689 = vmatpush1.bf16.msra.mxu0 0
        %1690 = vmatprep.subr.bf16.mxu0 0
        %1691 = vmatpush1.bf16.msra.mxu0 0
        %1692 = vmatprep.subr.bf16.mxu0 0
        %1693 = vmatpush1.bf16.msra.mxu0 0
        %1694 = vmatprep.subr.bf16.mxu0 0
        %1695 = vmatpush1.bf16.msra.mxu0 0
        %1696 = vmatprep.subr.bf16.mxu0 0
        %1697 = vmatpush1.bf16.msra.mxu0 0
        %1698 = vmatprep.subr.bf16.mxu0 0
        %1699 = vmatpush1.bf16.msra.mxu0 0
        %1700 = vmatprep.subr.bf16.mxu0 0
        %1701 = vmatpush1.bf16.msra.mxu0 0
        %1702 = vmatprep.subr.bf16.mxu0 0
        %1703 = vmatpush1.bf16.msra.mxu0 0
        %1704 = vmatprep.subr.bf16.mxu0 0
        %1705 = vmatpush1.bf16.msra.mxu0 0
        %1706 = vmatprep.subr.bf16.mxu0 0
        %1707 = vmatpush1.bf16.msra.mxu0 0
        %1708 = vmatprep.mubr.bf16.mxu0 0
        %1709 = vmatmul.mubr.bf16.gmra.mrb[0].mxu0 %v1671
        %v1710 = vpop.f32.mrb[0].mxu0
        %v1711 = vadd.f32 0.0, %v1710
        %v1712 = vpop.f32.mrb[0].mxu0
        %v1713 = vpop.f32.mrb[0].mxu0
        %v1714 = vpop.f32.mrb[0].mxu0
        %1715 = vdwg.mxu0
        %1716 = vrot.lane.b32.xlu0 %v1042, 104
        %v1717 = vpop.permute.xlu0 %1716
        %1718 = vrot.lane.b32.xlu0 %v1042, 72
        %v1719 = vpop.permute.xlu0 %1718
        %v1721 = vsel %vm1059, %v1717, 0
        %v1724 = vsel %vm1059, %v1719, 0
        %1726 = vmatprep.subr.bf16.mxu0 0
        %1727 = vmatpush1.bf16.xpose.msra.mxu0 %v1724
        %1728 = vmatprep.subr.bf16.mxu0 0
        %1729 = vmatpush1.bf16.xpose.msra.mxu0 0
        %1730 = vmatprep.subr.bf16.mxu0 0
        %1731 = vmatpush1.bf16.xpose.msra.mxu0 0
        %1732 = vmatprep.subr.bf16.mxu0 0
        %1733 = vmatpush1.bf16.xpose.msra.mxu0 0
        %1734 = vmatprep.subr.bf16.mxu0 0
        %1735 = vmatpush1.bf16.xpose.msra.mxu0 0
        %1736 = vmatprep.subr.bf16.mxu0 0
        %1737 = vmatpush1.bf16.xpose.msra.mxu0 0
        %1738 = vmatprep.subr.bf16.mxu0 0
        %1739 = vmatpush1.bf16.xpose.msra.mxu0 0
        %1740 = vmatprep.subr.bf16.mxu0 0
        %1741 = vmatpush1.bf16.xpose.msra.mxu0 0
        %1742 = vmatprep.subr.bf16.mxu0 0
        %1743 = vmatpush1.bf16.xpose.msra.mxu0 0
        %1744 = vmatprep.subr.bf16.mxu0 0
        %1745 = vmatpush1.bf16.xpose.msra.mxu0 0
        %1746 = vmatprep.subr.bf16.mxu0 0
        %1747 = vmatpush1.bf16.xpose.msra.mxu0 0
        %1748 = vmatprep.subr.bf16.mxu0 0
        %1749 = vmatpush1.bf16.xpose.msra.mxu0 0
        %1750 = vmatprep.subr.bf16.mxu0 0
        %1751 = vmatpush1.bf16.xpose.msra.mxu0 0
        %1752 = vmatprep.subr.bf16.mxu0 0
        %1753 = vmatpush1.bf16.xpose.msra.mxu0 0
        %1754 = vmatprep.subr.bf16.mxu0 0
        %1755 = vmatpush1.bf16.xpose.msra.mxu0 0
        %1756 = vmatprep.subr.bf16.mxu0 0
        %1757 = vmatpush1.bf16.xpose.msra.mxu0 0
        %1758 = vmatprep.mubr.bf16.mxu0 0
        %1759 = vmatmul.mubr.bf16.gmra.mrb[0].mxu0 %v1721
        %v1760 = vpop.f32.mrb[0].mxu0
        %v1761 = vadd.f32 %v1049, %v1760
        %v1762 = vpop.f32.mrb[0].mxu0
        %v1763 = vpop.f32.mrb[0].mxu0
        %v1764 = vpop.f32.mrb[0].mxu0
        %1765 = vdwg.mxu0
        %1766 = vrot.lane.b32.xlu0 %v1043, 104
        %v1767 = vpop.permute.xlu0 %1766
        %1768 = vrot.lane.b32.xlu0 %v1043, 72
        %v1769 = vpop.permute.xlu0 %1768
        %v1771 = vsel %vm1059, %v1767, 0
        %v1774 = vsel %vm1059, %v1769, 0
        %1776 = vmatprep.subr.bf16.mxu0 0
        %1777 = vmatpush1.bf16.xpose.msra.mxu0 %v1774
        %1778 = vmatprep.subr.bf16.mxu0 0
        %1779 = vmatpush1.bf16.xpose.msra.mxu0 0
        %1780 = vmatprep.subr.bf16.mxu0 0
        %1781 = vmatpush1.bf16.xpose.msra.mxu0 0
        %1782 = vmatprep.subr.bf16.mxu0 0
        %1783 = vmatpush1.bf16.xpose.msra.mxu0 0
        %1784 = vmatprep.subr.bf16.mxu0 0
        %1785 = vmatpush1.bf16.xpose.msra.mxu0 0
        %1786 = vmatprep.subr.bf16.mxu0 0
        %1787 = vmatpush1.bf16.xpose.msra.mxu0 0
        %1788 = vmatprep.subr.bf16.mxu0 0
        %1789 = vmatpush1.bf16.xpose.msra.mxu0 0
        %1790 = vmatprep.subr.bf16.mxu0 0
        %1791 = vmatpush1.bf16.xpose.msra.mxu0 0
        %1792 = vmatprep.subr.bf16.mxu0 0
        %1793 = vmatpush1.bf16.xpose.msra.mxu0 0
        %1794 = vmatprep.subr.bf16.mxu0 0
        %1795 = vmatpush1.bf16.xpose.msra.mxu0 0
        %1796 = vmatprep.subr.bf16.mxu0 0
        %1797 = vmatpush1.bf16.xpose.msra.mxu0 0
        %1798 = vmatprep.subr.bf16.mxu0 0
        %1799 = vmatpush1.bf16.xpose.msra.mxu0 0
        %1800 = vmatprep.subr.bf16.mxu0 0
        %1801 = vmatpush1.bf16.xpose.msra.mxu0 0
        %1802 = vmatprep.subr.bf16.mxu0 0
        %1803 = vmatpush1.bf16.xpose.msra.mxu0 0
        %1804 = vmatprep.subr.bf16.mxu0 0
        %1805 = vmatpush1.bf16.xpose.msra.mxu0 0
        %1806 = vmatprep.subr.bf16.mxu0 0
        %1807 = vmatpush1.bf16.xpose.msra.mxu0 0
        %1808 = vmatprep.mubr.bf16.mxu0 0
        %1809 = vmatmul.mubr.bf16.gmra.mrb[0].mxu0 %v1771
        %v1810 = vpop.f32.mrb[0].mxu0
        %v1811 = vadd.f32 %v1053, %v1810
        %v1812 = vpop.f32.mrb[0].mxu0
        %v1813 = vpop.f32.mrb[0].mxu0
        %v1814 = vpop.f32.mrb[0].mxu0
        %1815 = vdwg.mxu0
        %v1816 = vsel %vm1059, %v1761, -inf
        %1817 = vmax.xlane.f32.xlu0 %v1816
        %v1818 = vpop.xlane.xlu0 %1817
        %v1819 = vsel %vm1059, %v1811, -inf
        %1820 = vmax.xlane.f32.xlu0 %v1819
        %v1821 = vpop.xlane.xlu0 %1820
        %v1822 = vsub.f32 %v1761, %v1818
        %v1823 = vsub.f32 %v1811, %v1821
        %v1824 = vmul.f32 %v1822, 1.442695
        %v1825 = vpow.pop %v1824
        %v1826 = vmul.f32 %v1823, 1.442695
        %v1827 = vpow.pop %v1826
        %v1828 = vsel %vm1059, %v1825, 0.0
        %1829 = vadd.xlane.f32.xlu0 %v1828
        %v1830 = vpop.xlane.xlu0 %1829
        %v1831 = vsel %vm1059, %v1827, 0.0
        %1832 = vadd.xlane.f32.xlu0 %v1831
        %v1833 = vpop.xlane.xlu0 %1832
        %v1834 = vrcp.pop %v1830
        %v1835 = vrcp.pop %v1833
        %v1836 = vmul.f32 %v1825, %v1834
        %v1837 = vmul.f32 %v1827, %v1835
        %v1838 = vpack.c.bf16 %v1836, %v1836
        %v1839 = vpack.c.bf16 %v1837, %v1837
        %1840 = vrot.lane.b32.xlu0 %v1042, 40
        %v1841 = vpop.permute.xlu0 %1840
        %v1843 = vsel %vm1059, %v1838, 0
        %v1846 = vsel %vm1184, %v1841, 0
        %1848 = vmatprep.subr.bf16.mxu0 0
        %1849 = vmatpush1.bf16.msra.mxu0 %v1846
        %1850 = vmatprep.subr.bf16.mxu0 0
        %1851 = vmatpush1.bf16.msra.mxu0 0
        %1852 = vmatprep.subr.bf16.mxu0 0
        %1853 = vmatpush1.bf16.msra.mxu0 0
        %1854 = vmatprep.subr.bf16.mxu0 0
        %1855 = vmatpush1.bf16.msra.mxu0 0
        %1856 = vmatprep.subr.bf16.mxu0 0
        %1857 = vmatpush1.bf16.msra.mxu0 0
        %1858 = vmatprep.subr.bf16.mxu0 0
        %1859 = vmatpush1.bf16.msra.mxu0 0
        %1860 = vmatprep.subr.bf16.mxu0 0
        %1861 = vmatpush1.bf16.msra.mxu0 0
        %1862 = vmatprep.subr.bf16.mxu0 0
        %1863 = vmatpush1.bf16.msra.mxu0 0
        %1864 = vmatprep.subr.bf16.mxu0 0
        %1865 = vmatpush1.bf16.msra.mxu0 0
        %1866 = vmatprep.subr.bf16.mxu0 0
        %1867 = vmatpush1.bf16.msra.mxu0 0
        %1868 = vmatprep.subr.bf16.mxu0 0
        %1869 = vmatpush1.bf16.msra.mxu0 0
        %1870 = vmatprep.subr.bf16.mxu0 0
        %1871 = vmatpush1.bf16.msra.mxu0 0
        %1872 = vmatprep.subr.bf16.mxu0 0
        %1873 = vmatpush1.bf16.msra.mxu0 0
        %1874 = vmatprep.subr.bf16.mxu0 0
        %1875 = vmatpush1.bf16.msra.mxu0 0
        %1876 = vmatprep.subr.bf16.mxu0 0
        %1877 = vmatpush1.bf16.msra.mxu0 0
        %1878 = vmatprep.subr.bf16.mxu0 0
        %1879 = vmatpush1.bf16.msra.mxu0 0
        %1880 = vmatprep.mubr.bf16.mxu0 0
        %1881 = vmatmul.mubr.bf16.gmra.mrb[0].mxu0 %v1843
        %v1882 = vpop.f32.mrb[0].mxu0
        %v1883 = vadd.f32 0.0, %v1882
        %v1884 = vpop.f32.mrb[0].mxu0
        %v1885 = vpop.f32.mrb[0].mxu0
        %v1886 = vpop.f32.mrb[0].mxu0
        %1887 = vdwg.mxu0
        %1888 = vrot.lane.b32.xlu0 %v1043, 40
        %v1889 = vpop.permute.xlu0 %1888
        %v1891 = vsel %vm1059, %v1839, 0
        %v1894 = vsel %vm1184, %v1889, 0
        %1896 = vmatprep.subr.bf16.mxu0 0
        %1897 = vmatpush1.bf16.msra.mxu0 %v1894
        %1898 = vmatprep.subr.bf16.mxu0 0
        %1899 = vmatpush1.bf16.msra.mxu0 0
        %1900 = vmatprep.subr.bf16.mxu0 0
        %1901 = vmatpush1.bf16.msra.mxu0 0
        %1902 = vmatprep.subr.bf16.mxu0 0
        %1903 = vmatpush1.bf16.msra.mxu0 0
        %1904 = vmatprep.subr.bf16.mxu0 0
        %1905 = vmatpush1.bf16.msra.mxu0 0
        %1906 = vmatprep.subr.bf16.mxu0 0
        %1907 = vmatpush1.bf16.msra.mxu0 0
        %1908 = vmatprep.subr.bf16.mxu0 0
        %1909 = vmatpush1.bf16.msra.mxu0 0
        %1910 = vmatprep.subr.bf16.mxu0 0
        %1911 = vmatpush1.bf16.msra.mxu0 0
        %1912 = vmatprep.subr.bf16.mxu0 0
        %1913 = vmatpush1.bf16.msra.mxu0 0
        %1914 = vmatprep.subr.bf16.mxu0 0
        %1915 = vmatpush1.bf16.msra.mxu0 0
        %1916 = vmatprep.subr.bf16.mxu0 0
        %1917 = vmatpush1.bf16.msra.mxu0 0
        %1918 = vmatprep.subr.bf16.mxu0 0
        %1919 = vmatpush1.bf16.msra.mxu0 0
        %1920 = vmatprep.subr.bf16.mxu0 0
        %1921 = vmatpush1.bf16.msra.mxu0 0
        %1922 = vmatprep.subr.bf16.mxu0 0
        %1923 = vmatpush1.bf16.msra.mxu0 0
        %1924 = vmatprep.subr.bf16.mxu0 0
        %1925 = vmatpush1.bf16.msra.mxu0 0
        %1926 = vmatprep.subr.bf16.mxu0 0
        %1927 = vmatpush1.bf16.msra.mxu0 0
        %1928 = vmatprep.mubr.bf16.mxu0 0
        %1929 = vmatmul.mubr.bf16.gmra.mrb[0].mxu0 %v1891
        %v1930 = vpop.f32.mrb[0].mxu0
        %v1931 = vadd.f32 0.0, %v1930
        %v1932 = vpop.f32.mrb[0].mxu0
        %v1933 = vpop.f32.mrb[0].mxu0
        %v1934 = vpop.f32.mrb[0].mxu0
        %1935 = vdwg.mxu0
        %1938 = vrot.lane.b32.xlu0 %v1443, 8
        %v1939 = vpop.permute.xlu0 %1938
        %1940 = vrot.lane.b32.xlu0 %v1491, 8
        %v1941 = vpop.permute.xlu0 %1940
        %1946 = vrot.lane.b32.xlu0 %v1663, 16
        %v1947 = vpop.permute.xlu0 %1946
        %1948 = vrot.lane.b32.xlu0 %v1711, 16
        %v1949 = vpop.permute.xlu0 %1948
        %1954 = vrot.lane.b32.xlu0 %v1883, 24
        %v1955 = vpop.permute.xlu0 %1954
        %1956 = vrot.lane.b32.xlu0 %v1931, 24
        %v1957 = vpop.permute.xlu0 %1956
        %v1960 = vsel %vm1059, %v1223, %v1939
        %v1961 = vsel %vm1059, %v1271, %v1941
        %vm1962 = vcmask 130048
        %v1963 = vsel %vm1962, %v1960, %v1947
        %v1964 = vsel %vm1962, %v1961, %v1949
        %vm1965 = vcmask 195584
        %v1966 = vsel %vm1965, %v1963, %v1955
        %v1967 = vsel %vm1965, %v1964, %v1957
        %v1968 = vpack.c.bf16 %v1967, %v1966
        %v1969 = vld [vmem:[%s889] sm:$0xf]
        %v1970 = vld [vmem:[%s889 + $0x4] sm:$0xf]
        %v1971 = vld [vmem:[%s889 + $0x8] sm:$0xf]
        %v1972 = vld [vmem:[%s889 + $0xc] sm:$0xf]
        %v1973 = vld [vmem:[%s737] sm:$0x1]
        %v1975 = vlaneseq
        %v1976 = vshrl.u32 %v1975, 7
        %v1977 = vsub.s32 0, %v1976
        %v1978 = vrot.slane %v1973, %v1977
        %v1984 = vunpack.c.l.b16 %v1969
        %v1985 = vunpack.c.l.b16 %v1970
        %v1986 = vunpack.c.l.b16 %v1971
        %v1987 = vunpack.c.l.b16 %v1972
        %v1988 = vpack.c.b16 %v1985, %v1984
        %v1989 = vpack.c.b16 %v1987, %v1986
        %v1993 = vsel %vm916, %v1968, 0
        %1995 = vmatprep.subr.bf16.mxu0 0
        %1996 = vmatpush1.bf16.msra.mxu0 %v1988
        %1997 = vmatprep.subr.bf16.mxu0 0
        %1998 = vmatpush1.bf16.msra.mxu0 %v1989
        %1999 = vmatprep.subr.bf16.mxu0 0
        %2000 = vmatpush1.bf16.msra.mxu0 0
        %2001 = vmatprep.subr.bf16.mxu0 0
        %2002 = vmatpush1.bf16.msra.mxu0 0
        %2003 = vmatprep.subr.bf16.mxu0 0
        %2004 = vmatpush1.bf16.msra.mxu0 0
        %2005 = vmatprep.subr.bf16.mxu0 0
        %2006 = vmatpush1.bf16.msra.mxu0 0
        %2007 = vmatprep.subr.bf16.mxu0 0
        %2008 = vmatpush1.bf16.msra.mxu0 0
        %2009 = vmatprep.subr.bf16.mxu0 0
        %2010 = vmatpush1.bf16.msra.mxu0 0
        %2011 = vmatprep.subr.bf16.mxu0 0
        %2012 = vmatpush1.bf16.msra.mxu0 0
        %2013 = vmatprep.subr.bf16.mxu0 0
        %2014 = vmatpush1.bf16.msra.mxu0 0
        %2015 = vmatprep.subr.bf16.mxu0 0
        %2016 = vmatpush1.bf16.msra.mxu0 0
        %2017 = vmatprep.subr.bf16.mxu0 0
        %2018 = vmatpush1.bf16.msra.mxu0 0
        %2019 = vmatprep.subr.bf16.mxu0 0
        %2020 = vmatpush1.bf16.msra.mxu0 0
        %2021 = vmatprep.subr.bf16.mxu0 0
        %2022 = vmatpush1.bf16.msra.mxu0 0
        %2023 = vmatprep.subr.bf16.mxu0 0
        %2024 = vmatpush1.bf16.msra.mxu0 0
        %2025 = vmatprep.subr.bf16.mxu0 0
        %2026 = vmatpush1.bf16.msra.mxu0 0
        %2027 = vmatprep.mubr.bf16.mxu0 0
        %2028 = vmatmul.mubr.bf16.gmra.mrb[0].mxu0 %v1993
        %v2029 = vpop.f32.mrb[0].mxu0
        %v2030 = vadd.f32 %v1978, %v2029
        %v2031 = vpop.f32.mrb[0].mxu0
        %v2032 = vpop.f32.mrb[0].mxu0
        %v2033 = vadd.f32 %v1978, %v2032
        %v2034 = vpop.f32.mrb[0].mxu0
        %2035 = vdwg.mxu0
        %v2036 = vadd.f32 %v910, %v2030
        %v2037 = vadd.f32 %v911, %v2033
        %v2038 = vld [vmem:[%s761] sm:$0x1]
        %v2039 = vld [vmem:[%s769] sm:$0x1]
        %v2040 = vsel %vm916, %v2036, 0.0
        %2041 = vadd.xlane.f32.xlu0 %v2040
        %v2042 = vpop.xlane.xlu0 %2041
        %v2043 = vsel %vm916, %v2037, 0.0
        %2044 = vadd.xlane.f32.xlu0 %v2043
        %v2045 = vpop.xlane.xlu0 %2044
        %v2046 = vmul.f32 %v2042, %v923
        %v2047 = vmul.f32 %v2045, %v923
        %v2048 = vsub.f32 %v2036, %v2046
        %v2049 = vsub.f32 %v2037, %v2047
        %v2050 = vmul.f32 %v2048, %v2048
        %v2051 = vmul.f32 %v2049, %v2049
        %v2052 = vsel %vm916, %v2050, 0.0
        %2053 = vadd.xlane.f32.xlu0 %v2052
        %v2054 = vpop.xlane.xlu0 %2053
        %v2055 = vsel %vm916, %v2051, 0.0
        %2056 = vadd.xlane.f32.xlu0 %v2055
        %v2057 = vpop.xlane.xlu0 %2056
        %v2058 = vmul.f32 %v2054, 0.032258064
        %v2059 = vmul.f32 %v2057, 0.032258064
        %v2060 = vrsqrt.pop %v2058
        %v2061 = vmul.f32 %v2058, %v2060
        %vm2062 = vcmp.eq.f32.partialorder %v2058, inf
        %v2063 = vsel %vm2062, %v2058, %v2061
        %vm2064 = vcmp.eq.f32.partialorder %v2058, 0.0
        %v2065 = vand.u32 %v2058, 2147483648
        %v2066 = vsel %vm2064, %v2065, %v2063
        %v2067 = vrsqrt.pop %v2059
        %v2068 = vmul.f32 %v2059, %v2067
        %vm2069 = vcmp.eq.f32.partialorder %v2059, inf
        %v2070 = vsel %vm2069, %v2059, %v2068
        %vm2071 = vcmp.eq.f32.partialorder %v2059, 0.0
        %v2072 = vand.u32 %v2059, 2147483648
        %v2073 = vsel %vm2071, %v2072, %v2070
        %v2074 = vadd.f32 %v2066, 1e-06
        %v2075 = vadd.f32 %v2073, 1e-06
        %v2076 = vrcp.pop %v2074
        %v2077 = vrcp.pop %v2075
        %v2078 = vmul.f32 %v2048, %v2076
        %v2079 = vmul.f32 %v2049, %v2077
        %v2081 = vlaneseq
        %v2082 = vshrl.u32 %v2081, 7
        %v2083 = vsub.s32 0, %v2082
        %v2084 = vrot.slane %v2038, %v2083
        %v2086 = vmul.f32 %v2078, %v2084
        %v2087 = vmul.f32 %v2079, %v2084
        %v2089 = vlaneseq
        %v2090 = vshrl.u32 %v2089, 7
        %v2091 = vsub.s32 0, %v2090
        %v2092 = vrot.slane %v2039, %v2091
        %v2094 = vadd.f32 %v2086, %v2092
        %v2095 = vadd.f32 %v2087, %v2092
        %v2096 = vpack.c.bf16 %v2095, %v2094
        %v2097 = vld [vmem:[%s894] sm:$0xf]
        %v2098 = vld [vmem:[%s894 + $0x4] sm:$0xf]
        %v2099 = vld [vmem:[%s894 + $0x8] sm:$0xf]
        %v2100 = vld [vmem:[%s894 + $0xc] sm:$0xf]
        %v2101 = vld [vmem:[%s777] sm:$0x1]
        %v2103 = vlaneseq
        %v2104 = vshrl.u32 %v2103, 7
        %v2105 = vsub.s32 0, %v2104
        %v2106 = vrot.slane %v2101, %v2105
        %v2112 = vunpack.c.l.b16 %v2097
        %v2113 = vunpack.c.l.b16 %v2098
        %v2114 = vunpack.c.l.b16 %v2099
        %v2115 = vunpack.c.l.b16 %v2100
        %v2116 = vpack.c.b16 %v2113, %v2112
        %v2117 = vpack.c.b16 %v2115, %v2114
        %v2121 = vsel %vm916, %v2096, 0
        %2123 = vmatprep.subr.bf16.mxu0 0
        %2124 = vmatpush1.bf16.msra.mxu0 %v2116
        %2125 = vmatprep.subr.bf16.mxu0 0
        %2126 = vmatpush1.bf16.msra.mxu0 %v2117
        %2127 = vmatprep.subr.bf16.mxu0 0
        %2128 = vmatpush1.bf16.msra.mxu0 0
        %2129 = vmatprep.subr.bf16.mxu0 0
        %2130 = vmatpush1.bf16.msra.mxu0 0
        %2131 = vmatprep.subr.bf16.mxu0 0
        %2132 = vmatpush1.bf16.msra.mxu0 0
        %2133 = vmatprep.subr.bf16.mxu0 0
        %2134 = vmatpush1.bf16.msra.mxu0 0
        %2135 = vmatprep.subr.bf16.mxu0 0
        %2136 = vmatpush1.bf16.msra.mxu0 0
        %2137 = vmatprep.subr.bf16.mxu0 0
        %2138 = vmatpush1.bf16.msra.mxu0 0
        %2139 = vmatprep.subr.bf16.mxu0 0
        %2140 = vmatpush1.bf16.msra.mxu0 0
        %2141 = vmatprep.subr.bf16.mxu0 0
        %2142 = vmatpush1.bf16.msra.mxu0 0
        %2143 = vmatprep.subr.bf16.mxu0 0
        %2144 = vmatpush1.bf16.msra.mxu0 0
        %2145 = vmatprep.subr.bf16.mxu0 0
        %2146 = vmatpush1.bf16.msra.mxu0 0
        %2147 = vmatprep.subr.bf16.mxu0 0
        %2148 = vmatpush1.bf16.msra.mxu0 0
        %2149 = vmatprep.subr.bf16.mxu0 0
        %2150 = vmatpush1.bf16.msra.mxu0 0
        %2151 = vmatprep.subr.bf16.mxu0 0
        %2152 = vmatpush1.bf16.msra.mxu0 0
        %2153 = vmatprep.subr.bf16.mxu0 0
        %2154 = vmatpush1.bf16.msra.mxu0 0
        %2155 = vmatprep.mubr.bf16.mxu0 0
        %2156 = vmatmul.mubr.bf16.gmra.mrb[0].mxu0 %v2121
        %v2157 = vpop.f32.mrb[0].mxu0
        %v2158 = vadd.f32 %v2106, %v2157
        %v2159 = vpop.f32.mrb[0].mxu0
        %v2160 = vpop.f32.mrb[0].mxu0
        %v2161 = vadd.f32 %v2106, %v2160
        %v2162 = vpop.f32.mrb[0].mxu0
        %2163 = vdwg.mxu0
        %v2164 = vmax.f32 %v2158, 0.0
        %v2165 = vmax.f32 %v2161, 0.0
        %v2166 = vpack.c.bf16 %v2165, %v2164
        %v2167 = vld [vmem:[%s899] sm:$0xf]
        %v2168 = vld [vmem:[%s899 + $0x4] sm:$0xf]
        %v2169 = vld [vmem:[%s899 + $0x8] sm:$0xf]
        %v2170 = vld [vmem:[%s899 + $0xc] sm:$0xf]
        %v2171 = vld [vmem:[%s899 + $0x10] sm:$0xf]
        %v2172 = vld [vmem:[%s899 + $0x14] sm:$0xf]
        %v2173 = vld [vmem:[%s899 + $0x18] sm:$0xf]
        %v2174 = vld [vmem:[%s899 + $0x1c] sm:$0xf]
        %v2175 = vld [vmem:[%s785] sm:$0x1]
        %v2177 = vlaneseq
        %v2178 = vshrl.u32 %v2177, 7
        %v2179 = vsub.s32 0, %v2178
        %v2180 = vrot.slane %v2175, %v2179
        %v2190 = vunpack.c.l.b16 %v2167
        %v2191 = vunpack.c.l.b16 %v2168
        %v2192 = vunpack.c.l.b16 %v2169
        %v2193 = vunpack.c.l.b16 %v2170
        %v2194 = vunpack.c.l.b16 %v2171
        %v2195 = vunpack.c.l.b16 %v2172
        %v2196 = vunpack.c.l.b16 %v2173
        %v2197 = vunpack.c.l.b16 %v2174
        %v2198 = vpack.c.b16 %v2191, %v2190
        %v2199 = vpack.c.b16 %v2193, %v2192
        %v2200 = vpack.c.b16 %v2195, %v2194
        %v2201 = vpack.c.b16 %v2197, %v2196
        %vm2206 = vcmask 523264
        %v2208 = vsel %vm2206, %v2166, 0
        %2210 = vmatprep.subr.bf16.mxu0 0
        %2211 = vmatpush1.bf16.msra.mxu0 %v2198
        %2212 = vmatprep.subr.bf16.mxu0 0
        %2213 = vmatpush1.bf16.msra.mxu0 %v2199
        %2214 = vmatprep.subr.bf16.mxu0 0
        %2215 = vmatpush1.bf16.msra.mxu0 %v2200
        %2216 = vmatprep.subr.bf16.mxu0 0
        %2217 = vmatpush1.bf16.msra.mxu0 %v2201
        %2218 = vmatprep.subr.bf16.mxu0 0
        %2219 = vmatpush1.bf16.msra.mxu0 0
        %2220 = vmatprep.subr.bf16.mxu0 0
        %2221 = vmatpush1.bf16.msra.mxu0 0
        %2222 = vmatprep.subr.bf16.mxu0 0
        %2223 = vmatpush1.bf16.msra.mxu0 0
        %2224 = vmatprep.subr.bf16.mxu0 0
        %2225 = vmatpush1.bf16.msra.mxu0 0
        %2226 = vmatprep.subr.bf16.mxu0 0
        %2227 = vmatpush1.bf16.msra.mxu0 0
        %2228 = vmatprep.subr.bf16.mxu0 0
        %2229 = vmatpush1.bf16.msra.mxu0 0
        %2230 = vmatprep.subr.bf16.mxu0 0
        %2231 = vmatpush1.bf16.msra.mxu0 0
        %2232 = vmatprep.subr.bf16.mxu0 0
        %2233 = vmatpush1.bf16.msra.mxu0 0
        %2234 = vmatprep.subr.bf16.mxu0 0
        %2235 = vmatpush1.bf16.msra.mxu0 0
        %2236 = vmatprep.subr.bf16.mxu0 0
        %2237 = vmatpush1.bf16.msra.mxu0 0
        %2238 = vmatprep.subr.bf16.mxu0 0
        %2239 = vmatpush1.bf16.msra.mxu0 0
        %2240 = vmatprep.subr.bf16.mxu0 0
        %2241 = vmatpush1.bf16.msra.mxu0 0
        %2242 = vmatprep.mubr.bf16.mxu0 0
        %2243 = vmatmul.mubr.bf16.gmra.mrb[0].mxu0 %v2208
        %v2244 = vpop.f32.mrb[0].mxu0
        %v2245 = vadd.f32 %v2180, %v2244
        %v2246 = vpop.f32.mrb[0].mxu0
        %v2247 = vpop.f32.mrb[0].mxu0
        %v2248 = vadd.f32 %v2180, %v2247
        %v2249 = vpop.f32.mrb[0].mxu0
        %2250 = vdwg.mxu0
        %v2251 = vadd.f32 %v2036, %v2245
        %v2252 = vadd.f32 %v2037, %v2248
        %2253 = vst.msk [vmem:[#allocation2] sm:$0xff] %vm916, %v2251
        %2254 = vst.msk [vmem:[#allocation2 + $0x8] sm:$0xff] %vm916, %v2252
        %p2255 = scmp.eq.s32.totalorder %s32, 1
        // Predicated region
        $region137: #{tpu_custom_call.1} parent=91 // pred_check
          %p2256 = pneg %p2255
        $region138: #{tpu_custom_call.1} parent=91 // pred_check_branch
          %2258 = sbr.rel (%p2256) target = $region140
        $region139: #{tpu_custom_call.1} parent=91 // pred_region
          %v2259 = vld [vmem:[%s14] sm:$0x1]
          %v2260 = vld [vmem:[%s15] sm:$0x1]
          %v2261 = vsel %vm916, %v2251, 0.0
          %2262 = vadd.xlane.f32.xlu0 %v2261
          %v2263 = vpop.xlane.xlu0 %2262
          %v2264 = vsel %vm916, %v2252, 0.0
          %2265 = vadd.xlane.f32.xlu0 %v2264
          %v2266 = vpop.xlane.xlu0 %2265
          %v2267 = vmul.f32 %v2263, %v923
          %v2268 = vmul.f32 %v2266, %v923
          %v2269 = vsub.f32 %v2251, %v2267
          %v2270 = vsub.f32 %v2252, %v2268
          %v2271 = vmul.f32 %v2269, %v2269
          %v2272 = vmul.f32 %v2270, %v2270
          %v2273 = vsel %vm916, %v2271, 0.0
          %2274 = vadd.xlane.f32.xlu0 %v2273
          %v2275 = vpop.xlane.xlu0 %2274
          %v2276 = vsel %vm916, %v2272, 0.0
          %2277 = vadd.xlane.f32.xlu0 %v2276
          %v2278 = vpop.xlane.xlu0 %2277
          %v2279 = vmul.f32 %v2275, 0.032258064
          %v2280 = vmul.f32 %v2278, 0.032258064
          %v2281 = vrsqrt.pop %v2279
          %v2282 = vmul.f32 %v2279, %v2281
          %vm2283 = vcmp.eq.f32.partialorder %v2279, inf
          %v2284 = vsel %vm2283, %v2279, %v2282
          %vm2285 = vcmp.eq.f32.partialorder %v2279, 0.0
          %v2286 = vand.u32 %v2279, 2147483648
          %v2287 = vsel %vm2285, %v2286, %v2284
          %v2288 = vrsqrt.pop %v2280
          %v2289 = vmul.f32 %v2280, %v2288
          %vm2290 = vcmp.eq.f32.partialorder %v2280, inf
          %v2291 = vsel %vm2290, %v2280, %v2289
          %vm2292 = vcmp.eq.f32.partialorder %v2280, 0.0
          %v2293 = vand.u32 %v2280, 2147483648
          %v2294 = vsel %vm2292, %v2293, %v2291
          %v2295 = vadd.f32 %v2287, 1e-06
          %v2296 = vadd.f32 %v2294, 1e-06
          %v2297 = vrcp.pop %v2295
          %v2298 = vrcp.pop %v2296
          %v2299 = vmul.f32 %v2269, %v2297
          %v2300 = vmul.f32 %v2270, %v2298
          %v2302 = vlaneseq
          %v2303 = vshrl.u32 %v2302, 7
          %v2304 = vsub.s32 0, %v2303
          %v2305 = vrot.slane %v2259, %v2304
          %v2307 = vmul.f32 %v2299, %v2305
          %v2308 = vmul.f32 %v2300, %v2305
          %v2310 = vlaneseq
          %v2311 = vshrl.u32 %v2310, 7
          %v2312 = vsub.s32 0, %v2311
          %v2313 = vrot.slane %v2260, %v2312
          %v2315 = vadd.f32 %v2307, %v2313
          %v2316 = vadd.f32 %v2308, %v2313
          %v2317 = vpack.c.bf16 %v2316, %v2315
          %v2318 = vld [vmem:[%s16] sm:$0xf]
          %v2319 = vld [vmem:[%s16 + $0x4] sm:$0xf]
          %v2320 = vld [vmem:[%s16 + $0x8] sm:$0xf]
          %v2321 = vld [vmem:[%s16 + $0xc] sm:$0xf]
          %v2322 = vld [vmem:[%s17] sm:$0x1]
          %v2324 = vlaneseq
          %v2325 = vshrl.u32 %v2324, 7
          %v2326 = vsub.s32 0, %v2325
          %v2327 = vrot.slane %v2322, %v2326
          %v2333 = vunpack.c.l.b16 %v2318
          %v2334 = vunpack.c.l.b16 %v2319
          %v2335 = vunpack.c.l.b16 %v2320
          %v2336 = vunpack.c.l.b16 %v2321
          %v2337 = vpack.c.b16 %v2334, %v2333
          %v2338 = vpack.c.b16 %v2336, %v2335
          %v2342 = vsel %vm916, %v2317, 0
          %2344 = vmatprep.subr.bf16.mxu0 0
          %2345 = vmatpush1.bf16.msra.mxu0 %v2337
          %2346 = vmatprep.subr.bf16.mxu0 0
          %2347 = vmatpush1.bf16.msra.mxu0 %v2338
          %2348 = vmatprep.subr.bf16.mxu0 0
          %2349 = vmatpush1.bf16.msra.mxu0 0
          %2350 = vmatprep.subr.bf16.mxu0 0
          %2351 = vmatpush1.bf16.msra.mxu0 0
          %2352 = vmatprep.subr.bf16.mxu0 0
          %2353 = vmatpush1.bf16.msra.mxu0 0
          %2354 = vmatprep.subr.bf16.mxu0 0
          %2355 = vmatpush1.bf16.msra.mxu0 0
          %2356 = vmatprep.subr.bf16.mxu0 0
          %2357 = vmatpush1.bf16.msra.mxu0 0
          %2358 = vmatprep.subr.bf16.mxu0 0
          %2359 = vmatpush1.bf16.msra.mxu0 0
          %2360 = vmatprep.subr.bf16.mxu0 0
          %2361 = vmatpush1.bf16.msra.mxu0 0
          %2362 = vmatprep.subr.bf16.mxu0 0
          %2363 = vmatpush1.bf16.msra.mxu0 0
          %2364 = vmatprep.subr.bf16.mxu0 0
          %2365 = vmatpush1.bf16.msra.mxu0 0
          %2366 = vmatprep.subr.bf16.mxu0 0
          %2367 = vmatpush1.bf16.msra.mxu0 0
          %2368 = vmatprep.subr.bf16.mxu0 0
          %2369 = vmatpush1.bf16.msra.mxu0 0
          %2370 = vmatprep.subr.bf16.mxu0 0
          %2371 = vmatpush1.bf16.msra.mxu0 0
          %2372 = vmatprep.subr.bf16.mxu0 0
          %2373 = vmatpush1.bf16.msra.mxu0 0
          %2374 = vmatprep.subr.bf16.mxu0 0
          %2375 = vmatpush1.bf16.msra.mxu0 0
          %2376 = vmatprep.mubr.bf16.mxu0 0
          %2377 = vmatmul.mubr.bf16.gmra.mrb[0].mxu0 %v2342
          %v2378 = vpop.f32.mrb[0].mxu0
          %v2379 = vadd.f32 %v2327, %v2378
          %v2380 = vpop.f32.mrb[0].mxu0
          %v2381 = vpop.f32.mrb[0].mxu0
          %v2382 = vadd.f32 %v2327, %v2381
          %v2383 = vpop.f32.mrb[0].mxu0
          %2384 = vdwg.mxu0
          %2385 = vst [vmem:[#allocation16] sm:$0xff] %v2379
          %2386 = vst [vmem:[#allocation16 + $0x8] sm:$0xff] %v2382
        $region140: #{tpu_custom_call.1} parent=91 // pred_fallthru
          _
        // Predicated region
        $region141: #{tpu_custom_call.1} parent=91 // pred_check
          %p2387 = pneg %p483
        $region142: #{tpu_custom_call.1} parent=91 // pred_check_branch
          %2389 = sbr.rel (%p2387) target = $region144
        $region143: #{tpu_custom_call.1} parent=91 // pred_region
          %s2391 = ssub.s32 256, 256
          %2392 = vsyncadd [#allocation5], %s2391
          %s2393 = sshll.u32 [#allocation16], 4
          %s2394 = int_to_ptr.vmem [resolvable:$true] %s2393
          %2399 = dma.vmem_to_hbm [thread:$0]  %s2394, 256, %s18, [#allocation5], 128, 128, 8
        $region144: #{tpu_custom_call.1} parent=91 // pred_fallthru
          _
        // Predicated region
        $region145: #{tpu_custom_call.1} parent=91 // pred_check
          %p2400 = pneg %p483
        $region146: #{tpu_custom_call.1} parent=91 // pred_check_branch
          %2402 = sbr.rel (%p2400) target = $region148
        $region147: #{tpu_custom_call.1} parent=91 // pred_region
          %2403 = dma.done [#allocation5], 256
        $region148: #{tpu_custom_call.1} parent=91 // pred_fallthru
          _
      $region92: #{tpu_custom_call.1} parent=5 // pred_fallthru
        _
      %p2404 = scmp.le.s32.totalorder 2, %s27
      // Predicated region
      $region149: #{tpu_custom_call.1} parent=5 // pred_check
        %p2405 = pneg %p2404
      $region150: #{tpu_custom_call.1} parent=5 // pred_check_branch
        %2407 = sbr.rel (%p2405) target = $region152
      $region151: #{tpu_custom_call.1} parent=5 // pred_region
        %s2408 = ssub.s32 %s27, 2
      $region152: #{tpu_custom_call.1} parent=5 // pred_fallthru
        _
    $region6: #{tpu_custom_call.1} parent=1 // loop_footer
      %s31 = sadd.s32 1, %s27
    $region7: #{tpu_custom_call.1} parent=1 // loop_footer_branch
      %26 = sbr.rel target = $region3
    $region8: #{tpu_custom_call.1} parent=1 // loop_exit
      _
    %2409 = vsyncpa [#allocation4], 1
    %s2410 = scalar_lea.sflag [#allocation4], 1
    %2411 = vsyncpa %s2410, 1
    %2412 = vsyncpa [#allocation7], 1
    %2413 = vsyncpa [#allocation5], 1
    %s2414 = scalar_lea.sflag [#allocation5], 1
    %2415 = vsyncpa %s2414, 1

</llo_original>
